<compile_context>
chip_gen: v7x
topology: tpu7x:2x2x1
jax: 0.10.0
libtpu: 0.0.40
codegen_flags: <defaults>
</compile_context>

<pallas_src>
import functools

import jax
import jax.numpy as jnp
from jax.experimental import pallas as pl
from jax.experimental.pallas import tpu as pltpu


def _round_up(x, m):
    return ((x + m - 1) // m) * m


def _tile_bytes(rows, cols, dtype):
    """Conservative VMEM footprint of a 2-D tile (sublane/lane padded)."""
    r = _round_up(max(rows, 1), 8)
    c = _round_up(max(cols, 1), 128)
    return r * c * jnp.dtype(dtype).itemsize


def _gcc_gcn_fused_kernel(adj_ref, dinv_ref, x_ref, w1_ref, b1_ref,
                          w2_ref, b2_ref, pool_ref,
                          node_ref, graph_ref):
    """One graph per grid step: 2 GCN layers + masked mean-pool readout."""
    a = adj_ref[...]                      # (n_p, n_p) A + I (bf16, 0/1 exact)
    d_inv = dinv_ref[...]                 # (n_p, 1)   D^-1/2, f32

    # --- layer 1: H1 = ReLU(D^-1/2 A_t D^-1/2 X W1 + b1) --------------------
    xw = jnp.dot(x_ref[...], w1_ref[...], preferred_element_type=jnp.float32)
    agg = jnp.dot(a, (d_inv * xw).astype(a.dtype),
                  preferred_element_type=jnp.float32)
    h1 = jnp.maximum(d_inv * agg + b1_ref[...], 0.0)            # f32 VPU

    # --- layer 2: H2 = D^-1/2 A_t D^-1/2 H1 W2 + b2 -------------------------
    hw = jnp.dot(h1.astype(w2_ref.dtype), w2_ref[...],
                 preferred_element_type=jnp.float32)
    agg2 = jnp.dot(a, (d_inv * hw).astype(a.dtype),
                   preferred_element_type=jnp.float32)
    h2 = d_inv * agg2 + b2_ref[...]

    node_ref[...] = h2.astype(node_ref.dtype)

    # --- graph readout: masked mean-pool as a sublane (XLU) reduction -------
    # pool_ref is (n_p, 1) with 1/N_real on real nodes, 0 on padded nodes.
    graph_ref[...] = jnp.sum(pool_ref[...] * h2, axis=0,
                             keepdims=True).astype(graph_ref.dtype)


@functools.partial(jax.jit, static_argnames=("use_bf16",))
def gcc_forward_batched(adj, node_feats, params, *, use_bf16=True):
    """Batched GCC 'gcn' forward: adj (B,N,N), node_feats (B,N,F_in)."""
    (w1, b1), (w2, b2) = params
    B, n, _ = adj.shape
    f_in = node_feats.shape[-1]
    hidden = w1.shape[-1]
    f_out = w2.shape[-1]

    n_p = _round_up(n, 128)
    f_in_p = _round_up(f_in, 128)
    h_p = _round_up(hidden, 128)
    f_out_p = _round_up(f_out, 128)

    f32 = jnp.float32
    mm_dtype = jnp.bfloat16 if use_bf16 else jnp.float32

    # --- wrapper-side normalization / padding (fused into one XLA pad pass) -
    # Padded nodes get a self loop (deg 1), never touch real nodes, and are
    # masked out of the pooling vector, so zero padding is exact.
    adj_p = jnp.pad(adj.astype(f32), ((0, 0), (0, n_p - n), (0, n_p - n)))
    a_t = adj_p + jnp.eye(n_p, dtype=f32)[None]                 # A + I
    deg = jnp.sum(a_t, axis=-1, keepdims=True)                  # (B, n_p, 1)
    d_inv = jax.lax.rsqrt(deg)                                  # D^-1/2, f32
    a_mm = a_t.astype(mm_dtype)                                 # 0/1 exact

    x_p = jnp.pad(node_feats.astype(f32),
                  ((0, 0), (0, n_p - n), (0, f_in_p - f_in))).astype(mm_dtype)
    w1_p = jnp.pad(w1.astype(f32),
                   ((0, f_in_p - f_in), (0, h_p - hidden))).astype(mm_dtype)
    w2_p = jnp.pad(w2.astype(f32),
                   ((0, h_p - hidden), (0, f_out_p - f_out))).astype(mm_dtype)
    b1_p = jnp.pad(b1.astype(f32).reshape(1, -1), ((0, 0), (0, h_p - hidden)))
    b2_p = jnp.pad(b2.astype(f32).reshape(1, -1), ((0, 0), (0, f_out_p - f_out)))

    # (n_p, 1) masked mean-pool weights, shared across the batch.
    pool = ((jnp.arange(n_p) < n).astype(f32) / float(n)).reshape(n_p, 1)

    # --- shape-derived VMEM budget (double-buffered blocks + temporaries) ---
    mm_bytes = jnp.dtype(mm_dtype).itemsize
    io_bytes = 2 * (
        _tile_bytes(n_p, n_p, mm_dtype)            # adj block
        + _tile_bytes(n_p, 1, f32)                 # d_inv block
        + _tile_bytes(n_p, f_in_p, mm_dtype)       # x block
        + _tile_bytes(f_in_p, h_p, mm_dtype)       # w1
        + _tile_bytes(1, h_p, f32)                 # b1
        + _tile_bytes(h_p, f_out_p, mm_dtype)      # w2
        + _tile_bytes(1, f_out_p, f32)             # b2
        + _tile_bytes(n_p, 1, f32)                 # pool
        + _tile_bytes(n_p, f_out_p, f32)           # node out block
        + _tile_bytes(1, f_out_p, f32)             # graph out block
    )
    tmp_bytes = 8 * _tile_bytes(n_p, max(f_in_p, h_p, f_out_p), f32)
    vmem_limit = max(16 << 20, min(64 << 20, io_bytes + tmp_bytes + (4 << 20)))
    del mm_bytes

    def bmap(b):          # per-graph blocks
        return (b, 0, 0)

    def smap(b):          # shared / resident blocks
        return (0, 0)

    node_pad, graph_pad = pl.pallas_call(
        _gcc_gcn_fused_kernel,
        grid=(B,),
        out_shape=(
            jax.ShapeDtypeStruct((B, n_p, f_out_p), jnp.float32),
            jax.ShapeDtypeStruct((B, 1, f_out_p), jnp.float32),
        ),
        in_specs=[
            pl.BlockSpec((None, n_p, n_p), bmap),       # A + I      (bf16)
            pl.BlockSpec((None, n_p, 1), bmap),         # d_inv      (f32)
            pl.BlockSpec((None, n_p, f_in_p), bmap),    # X          (bf16)
            pl.BlockSpec((f_in_p, h_p), smap),          # W1 (resident)
            pl.BlockSpec((1, h_p), smap),               # b1
            pl.BlockSpec((h_p, f_out_p), smap),         # W2 (resident)
            pl.BlockSpec((1, f_out_p), smap),           # b2
            pl.BlockSpec((n_p, 1), smap),               # pool
        ],
        out_specs=(
            pl.BlockSpec((None, n_p, f_out_p), bmap),   # node embeddings
            pl.BlockSpec((None, 1, f_out_p), bmap),     # graph embedding
        ),
        compiler_params=pltpu.CompilerParams(
            dimension_semantics=("parallel",),          # v7x: 2 TCs; noop else
            vmem_limit_bytes=int(vmem_limit),
        ),
    )(a_mm, d_inv, x_p, w1_p, b1_p, w2_p, b2_p, pool)

    return node_pad[:, :n, :f_out], graph_pad[:, :, :f_out]


def gcc_forward(adj, node_feats, params, *, use_bf16=True):
    """GCC.forward(g, node_feats) — single graph, 'gcn' encoder branch."""
    node_b, graph_b = gcc_forward_batched(adj[None], node_feats[None], params,
                                          use_bf16=use_bf16)
    return node_b[0], graph_b[0]


if __name__ == "__main__":
    B, N, F_IN, HIDDEN, F_OUT = 4, 16, 32, 32, 32

    key = jax.random.PRNGKey(0)
    k_adj, k_feat, k_w1, k_w2 = jax.random.split(key, 4)

    # deterministic small random graphs (symmetric, no self loops here —
    # self loops are added by the wrapper-side normalization)
    logits = jax.random.uniform(k_adj, (B, N, N))
    adj = (logits < 0.3).astype(jnp.float32)
    adj = jnp.maximum(adj, jnp.swapaxes(adj, -1, -2))
    adj = adj * (1.0 - jnp.eye(N, dtype=jnp.float32))

    node_feats = jax.random.normal(k_feat, (B, N, F_IN), dtype=jnp.float32)

    # deterministic parameter init (glorot-ish scaling), zero biases
    w1 = jax.random.normal(k_w1, (F_IN, HIDDEN), dtype=jnp.float32) / jnp.sqrt(F_IN)
    b1 = jnp.zeros((1, HIDDEN), dtype=jnp.float32)
    w2 = jax.random.normal(k_w2, (HIDDEN, F_OUT), dtype=jnp.float32) / jnp.sqrt(HIDDEN)
    b2 = jnp.zeros((1, F_OUT), dtype=jnp.float32)
    params = ((w1, b1), (w2, b2))

    # batched path (one pallas_call for all B subgraphs)
    node_emb, graph_emb = gcc_forward_batched(adj, node_feats, params)
    # single-graph path (matches the original GCC.forward(g, node_feats))
    node_0, graph_0 = gcc_forward(adj[0], node_feats[0], params)
    jax.block_until_ready((node_emb, graph_emb, node_0, graph_0))

    assert node_emb.shape == (B, N, F_OUT)
    assert graph_emb.shape == (B, 1, F_OUT)
    assert node_0.shape == (N, F_OUT)
    assert graph_0.shape == (1, F_OUT)
    assert bool(jnp.all(jnp.isfinite(node_emb)))
    assert bool(jnp.all(jnp.isfinite(graph_emb)))
    assert bool(jnp.all(jnp.isfinite(node_0)))
    assert bool(jnp.all(jnp.isfinite(graph_0)))
    # batched and single-graph paths run the same kernel on the same data
    assert bool(jnp.allclose(node_emb[0], node_0, atol=1e-5))
    assert bool(jnp.allclose(graph_emb[0], graph_0, atol=1e-5))
    print("KERNEL_OK")
</pallas_src>

<mosaic_0001>
module attributes {stable_mosaic.version = 11 : i64} {
  func.func @_gcc_gcn_fused_kernel(%arg0: i32, %arg1: memref<1x128x128xbf16, #tpu.memory_space<vmem>>, %arg2: memref<1x128x1xf32, #tpu.memory_space<vmem>>, %arg3: memref<1x128x128xbf16, #tpu.memory_space<vmem>>, %arg4: memref<128x128xbf16, #tpu.memory_space<vmem>>, %arg5: memref<1x128xf32, #tpu.memory_space<vmem>>, %arg6: memref<128x128xbf16, #tpu.memory_space<vmem>>, %arg7: memref<1x128xf32, #tpu.memory_space<vmem>>, %arg8: memref<128x1xf32, #tpu.memory_space<vmem>>, %arg9: memref<1x128x128xf32, #tpu.memory_space<vmem>>, %arg10: memref<1x1x128xf32, #tpu.memory_space<vmem>>) attributes {dimension_semantics = [#tpu.dimension_semantics<parallel>], iteration_bounds = array<i64: 4>, scalar_prefetch = 0 : i64, scratch_operands = 0 : i64, tpu.core_type = #tpu.core_type<tc>, window_params = [{transform_indices = @transform_0, window_bounds = array<i64: 1, 128, 128>}, {transform_indices = @transform_1, window_bounds = array<i64: 1, 128, 1>}, {transform_indices = @transform_2, window_bounds = array<i64: 1, 128, 128>}, {pipeline_mode = #tpu.pipeline_mode<synchronous>, transform_indices = @transform_3, window_bounds = array<i64: 128, 128>}, {pipeline_mode = #tpu.pipeline_mode<synchronous>, transform_indices = @transform_4, window_bounds = array<i64: 1, 128>}, {pipeline_mode = #tpu.pipeline_mode<synchronous>, transform_indices = @transform_5, window_bounds = array<i64: 128, 128>}, {pipeline_mode = #tpu.pipeline_mode<synchronous>, transform_indices = @transform_6, window_bounds = array<i64: 1, 128>}, {pipeline_mode = #tpu.pipeline_mode<synchronous>, transform_indices = @transform_7, window_bounds = array<i64: 128, 1>}, {transform_indices = @transform_8, window_bounds = array<i64: 1, 128, 128>}, {transform_indices = @transform_9, window_bounds = array<i64: 1, 1, 128>}]} {
    %c0 = arith.constant 0 : index
    %c0_0 = arith.constant 0 : index
    %c0_1 = arith.constant 0 : index
    %0 = vector.load %arg1[%c0, %c0_0, %c0_1] : memref<1x128x128xbf16, #tpu.memory_space<vmem>>, vector<1x128x128xbf16>
    %1 = vector.shape_cast %0 : vector<1x128x128xbf16> to vector<128x128xbf16>
    %c0_2 = arith.constant 0 : index
    %c0_3 = arith.constant 0 : index
    %c0_4 = arith.constant 0 : index
    %2 = vector.load %arg2[%c0_2, %c0_3, %c0_4] : memref<1x128x1xf32, #tpu.memory_space<vmem>>, vector<1x128x1xf32>
    %3 = vector.shape_cast %2 : vector<1x128x1xf32> to vector<128x1xf32>
    %c0_5 = arith.constant 0 : index
    %c0_6 = arith.constant 0 : index
    %c0_7 = arith.constant 0 : index
    %4 = vector.load %arg3[%c0_5, %c0_6, %c0_7] : memref<1x128x128xbf16, #tpu.memory_space<vmem>>, vector<1x128x128xbf16>
    %5 = vector.shape_cast %4 : vector<1x128x128xbf16> to vector<128x128xbf16>
    %c0_8 = arith.constant 0 : index
    %c0_9 = arith.constant 0 : index
    %6 = vector.load %arg4[%c0_8, %c0_9] : memref<128x128xbf16, #tpu.memory_space<vmem>>, vector<128x128xbf16>
    %cst = arith.constant dense<0.000000e+00> : vector<128x128xf32>
    %7 = tpu.matmul %5, %6, %cst {dimension_numbers = #tpu.dot_dimension_numbers<[1], [0], [0], [1], [0, 0, 1, 1], [], []>} : vector<128x128xbf16>, vector<128x128xbf16>, vector<128x128xf32> -> vector<128x128xf32>
    %8 = vector.broadcast %3 : vector<128x1xf32> to vector<128x128xf32>
    %9 = arith.mulf %8, %7 : vector<128x128xf32>
    %10 = arith.truncf %9 : vector<128x128xf32> to vector<128x128xbf16>
    %cst_10 = arith.constant dense<0.000000e+00> : vector<128x128xf32>
    %11 = tpu.matmul %1, %10, %cst_10 {dimension_numbers = #tpu.dot_dimension_numbers<[1], [0], [0], [1], [0, 0, 1, 1], [], []>} : vector<128x128xbf16>, vector<128x128xbf16>, vector<128x128xf32> -> vector<128x128xf32>
    %12 = vector.broadcast %3 : vector<128x1xf32> to vector<128x128xf32>
    %13 = arith.mulf %12, %11 : vector<128x128xf32>
    %c0_11 = arith.constant 0 : index
    %c0_12 = arith.constant 0 : index
    %14 = vector.load %arg5[%c0_11, %c0_12] : memref<1x128xf32, #tpu.memory_space<vmem>>, vector<1x128xf32>
    %15 = vector.broadcast %14 : vector<1x128xf32> to vector<128x128xf32>
    %16 = arith.addf %13, %15 : vector<128x128xf32>
    %cst_13 = arith.constant 0.000000e+00 : f32
    %17 = vector.broadcast %cst_13 : f32 to vector<128x128xf32>
    %18 = arith.maximumf %16, %17 : vector<128x128xf32>
    %19 = arith.truncf %18 : vector<128x128xf32> to vector<128x128xbf16>
    %c0_14 = arith.constant 0 : index
    %c0_15 = arith.constant 0 : index
    %20 = vector.load %arg6[%c0_14, %c0_15] : memref<128x128xbf16, #tpu.memory_space<vmem>>, vector<128x128xbf16>
    %cst_16 = arith.constant dense<0.000000e+00> : vector<128x128xf32>
    %21 = tpu.matmul %19, %20, %cst_16 {dimension_numbers = #tpu.dot_dimension_numbers<[1], [0], [0], [1], [0, 0, 1, 1], [], []>} : vector<128x128xbf16>, vector<128x128xbf16>, vector<128x128xf32> -> vector<128x128xf32>
    %22 = vector.broadcast %3 : vector<128x1xf32> to vector<128x128xf32>
    %23 = arith.mulf %22, %21 : vector<128x128xf32>
    %24 = arith.truncf %23 : vector<128x128xf32> to vector<128x128xbf16>
    %cst_17 = arith.constant dense<0.000000e+00> : vector<128x128xf32>
    %25 = tpu.matmul %1, %24, %cst_17 {dimension_numbers = #tpu.dot_dimension_numbers<[1], [0], [0], [1], [0, 0, 1, 1], [], []>} : vector<128x128xbf16>, vector<128x128xbf16>, vector<128x128xf32> -> vector<128x128xf32>
    %26 = vector.broadcast %3 : vector<128x1xf32> to vector<128x128xf32>
    %27 = arith.mulf %26, %25 : vector<128x128xf32>
    %c0_18 = arith.constant 0 : index
    %c0_19 = arith.constant 0 : index
    %28 = vector.load %arg7[%c0_18, %c0_19] : memref<1x128xf32, #tpu.memory_space<vmem>>, vector<1x128xf32>
    %29 = vector.broadcast %28 : vector<1x128xf32> to vector<128x128xf32>
    %30 = arith.addf %27, %29 : vector<128x128xf32>
    %c0_20 = arith.constant 0 : index
    %c0_21 = arith.constant 0 : index
    %c0_22 = arith.constant 0 : index
    %31 = vector.load %arg9[%c0_20, %c0_21, %c0_22] : memref<1x128x128xf32, #tpu.memory_space<vmem>>, vector<1x128x128xf32>
    %32 = vector.shape_cast %31 : vector<1x128x128xf32> to vector<128x128xf32>
    %33 = vector.shape_cast %30 : vector<128x128xf32> to vector<1x128x128xf32>
    tpu.vector_store %arg9[%c0_20, %c0_21, %c0_22], %33 {strides = array<i32>} : memref<1x128x128xf32, #tpu.memory_space<vmem>>, vector<1x128x128xf32>,
    %c0_23 = arith.constant 0 : index
    %c0_24 = arith.constant 0 : index
    %34 = vector.load %arg8[%c0_23, %c0_24] : memref<128x1xf32, #tpu.memory_space<vmem>>, vector<128x1xf32>
    %35 = vector.broadcast %34 : vector<128x1xf32> to vector<128x128xf32>
    %36 = arith.mulf %35, %30 : vector<128x128xf32>
    %cst_25 = arith.constant dense<0.000000e+00> : vector<128xf32>
    %37 = vector.multi_reduction <add>, %36, %cst_25 [0] : vector<128x128xf32> to vector<128xf32>
    %38 = vector.shape_cast %37 : vector<128xf32> to vector<1x128xf32>
    %c0_26 = arith.constant 0 : index
    %c0_27 = arith.constant 0 : index
    %c0_28 = arith.constant 0 : index
    %39 = vector.load %arg10[%c0_26, %c0_27, %c0_28] : memref<1x1x128xf32, #tpu.memory_space<vmem>>, vector<1x1x128xf32>
    %40 = vector.shape_cast %39 : vector<1x1x128xf32> to vector<1x128xf32>
    %41 = vector.shape_cast %38 : vector<1x128xf32> to vector<1x1x128xf32>
    tpu.vector_store %arg10[%c0_26, %c0_27, %c0_28], %41 {strides = array<i32>} : memref<1x1x128xf32, #tpu.memory_space<vmem>>, vector<1x1x128xf32>,
    return
  }
  func.func @transform_0(%arg0: i32) -> (i32, i32, i32) {
    %c0_i32 = arith.constant 0 : i32
    %c0_i32_0 = arith.constant 0 : i32
    %c0_i32_1 = arith.constant 0 : i32
    return %arg0, %c0_i32, %c0_i32_0 : i32, i32, i32
  }
  func.func @transform_1(%arg0: i32) -> (i32, i32, i32) {
    %c0_i32 = arith.constant 0 : i32
    %c0_i32_0 = arith.constant 0 : i32
    %c0_i32_1 = arith.constant 0 : i32
    return %arg0, %c0_i32, %c0_i32_0 : i32, i32, i32
  }
  func.func @transform_2(%arg0: i32) -> (i32, i32, i32) {
    %c0_i32 = arith.constant 0 : i32
    %c0_i32_0 = arith.constant 0 : i32
    %c0_i32_1 = arith.constant 0 : i32
    return %arg0, %c0_i32, %c0_i32_0 : i32, i32, i32
  }
  func.func @transform_3(%arg0: i32) -> (i32, i32) {
    %c0_i32 = arith.constant 0 : i32
    %c0_i32_0 = arith.constant 0 : i32
    %c0_i32_1 = arith.constant 0 : i32
    return %c0_i32, %c0_i32_0 : i32, i32
  }
  func.func @transform_4(%arg0: i32) -> (i32, i32) {
    %c0_i32 = arith.constant 0 : i32
    %c0_i32_0 = arith.constant 0 : i32
    %c0_i32_1 = arith.constant 0 : i32
    return %c0_i32, %c0_i32_0 : i32, i32
  }
  func.func @transform_5(%arg0: i32) -> (i32, i32) {
    %c0_i32 = arith.constant 0 : i32
    %c0_i32_0 = arith.constant 0 : i32
    %c0_i32_1 = arith.constant 0 : i32
    return %c0_i32, %c0_i32_0 : i32, i32
  }
  func.func @transform_6(%arg0: i32) -> (i32, i32) {
    %c0_i32 = arith.constant 0 : i32
    %c0_i32_0 = arith.constant 0 : i32
    %c0_i32_1 = arith.constant 0 : i32
    return %c0_i32, %c0_i32_0 : i32, i32
  }
  func.func @transform_7(%arg0: i32) -> (i32, i32) {
    %c0_i32 = arith.constant 0 : i32
    %c0_i32_0 = arith.constant 0 : i32
    %c0_i32_1 = arith.constant 0 : i32
    return %c0_i32, %c0_i32_0 : i32, i32
  }
  func.func @transform_8(%arg0: i32) -> (i32, i32, i32) {
    %c0_i32 = arith.constant 0 : i32
    %c0_i32_0 = arith.constant 0 : i32
    %c0_i32_1 = arith.constant 0 : i32
    return %arg0, %c0_i32, %c0_i32_0 : i32, i32, i32
  }
  func.func @transform_9(%arg0: i32) -> (i32, i32, i32) {
    %c0_i32 = arith.constant 0 : i32
    %c0_i32_0 = arith.constant 0 : i32
    %c0_i32_1 = arith.constant 0 : i32
    return %arg0, %c0_i32, %c0_i32_0 : i32, i32, i32
  }
}

</mosaic_0001>

<llo_original>
// kernel: gcc_forward_batched.1
$region0: #{gcc_forward_batched.1}
  #allocation0 [shape = 'u32[]', space=smem, size = 0x4, offset = 0x4, fixed_abs, tag = 'smem constant byte address 0x4 - core index']
  #allocation1 [shape = 'u32[144,128]{1,0:T(1,128)}', space=vmem, size = 0x12000, scoped, tag = 'internal scratch']
  %s0 = inlined_call_operand.vmem [shape: bf16[4,128,128], index: 0, kind: input, shape index: {}]
  %s1 = inlined_call_operand.vmem [shape: f32[4,128,1], index: 1, kind: input, shape index: {}]
  %s2 = inlined_call_operand.vmem [shape: bf16[4,128,128], index: 2, kind: input, shape index: {}]
  %s3 = inlined_call_operand.vmem [shape: bf16[128,128], index: 3, kind: input, shape index: {}]
  %s4 = inlined_call_operand.vmem [shape: f32[1,128], index: 4, kind: input, shape index: {}]
  %s5 = inlined_call_operand.vmem [shape: bf16[128,128], index: 5, kind: input, shape index: {}]
  %s6 = inlined_call_operand.vmem [shape: f32[1,128], index: 6, kind: input, shape index: {}]
  %s7 = inlined_call_operand.vmem [shape: f32[128,1], index: 7, kind: input, shape index: {}]
  %s8 = inlined_call_operand.vmem [shape: f32[4,128,128], index: 8, kind: output, shape index: {0}]
  %s9 = inlined_call_operand.hbm [shape: f32[4,1,128], index: 9, kind: output, shape index: {1}]
  %10 = xla_tuple %s8, %s9
  %s11 = sld [smem:[#allocation0]]
  $region73: #{gcc_forward_batched.1} parent=0
    _
  %s13 = ssub.s32 1, %s11
  %s14 = scalar_select 0, %s13, %s11
  $region1: #{gcc_forward_batched.1} parent=0
    #allocation2 [shape = 'u8[1024]{0}', space=vmem, size = 0x400, scoped, tag = 'output window, operand 1']
    #allocation3 [shape = 's32[2]{0}', space=sflag, size = 0x8, scoped, tag = 'scoped memory for gcc_forward_batched.1']
    %15 = vsyncpa [#allocation3], 0
    %s16 = scalar_lea.sflag [#allocation3], 1
    %17 = vsyncpa %s16, 0
    loop: start=0, step=1, limit=6
    $region2: #{gcc_forward_batched.1} parent=1 // loop_pre_header
      _
    $region3: #{gcc_forward_batched.1} parent=1 // loop_header
      %s19 = sphi 0, %s23
      %p20 = scmp.ge.s32.totalorder %s19, 6
      %s29 = sphi 0, %s31
      %s32 = sphi 0, %s29
      %s33 = sphi 0, %s32
      %s49 = sphi 0, %s33
      %s55 = sphi 0, %s57
      %s58 = sphi 0, %s55
      %s59 = sphi 0, %s58
      %s75 = sphi 0, %s59
      %s81 = sphi 0, %s83
      %s84 = sphi 0, %s81
      %s85 = sphi 0, %s84
      %s101 = sphi 0, %s85
      %s105 = sphi 0, %s105
      %s107 = sphi 0, %s105
      %s108 = sphi 0, %s107
      %s122 = sphi 0, %s108
      %s126 = sphi 0, %s126
      %s128 = sphi 0, %s126
      %s129 = sphi 0, %s128
      %s143 = sphi 0, %s129
      %s147 = sphi 0, %s147
      %s149 = sphi 0, %s147
      %s150 = sphi 0, %s149
      %s164 = sphi 0, %s150
      %s168 = sphi 0, %s168
      %s170 = sphi 0, %s168
      %s171 = sphi 0, %s170
      %s185 = sphi 0, %s171
      %s189 = sphi 0, %s189
      %s191 = sphi 0, %s189
      %s192 = sphi 0, %s191
      %s206 = sphi 0, %s192
      %s212 = sphi 0, %s214
      %s215 = sphi 0, %s212
      %s216 = sphi 0, %s215
      %s232 = sphi 0, %s216
      %s238 = sphi 0, %s240
      %s241 = sphi 0, %s238
      %s242 = sphi 0, %s241
      %s258 = sphi 0, %s242
    $region4: #{gcc_forward_batched.1} parent=1 // loop_header_branch
      %22 = sbr.rel (%p20) target = $region8
    $region5: #{gcc_forward_batched.1} parent=1 // loop_body
      %s24 = ssub.s32 %s19, 1
      %s25 = ssub.s32 %s19, 2
      %s26 = sadd.s32 %s19, 1
      %s27 = ssub.s32 %s19, %s26
      %p28 = scmp.eq.s32.totalorder %s27, 0
      %s30 = sadd.s32 %s29, 1
      %s31 = scalar_select %p28, %s29, %s30
      %p34 = pneg %p28
      %p35 = scmp.eq.s32.totalorder %s19, 3
      %p36 = por %p34, %p35
      %p37 = scmp.ne.s32.totalorder %s29, %s32
      %p38 = scmp.eq.s32.totalorder %s19, 0
      %p39 = por %p37, %p38
      %p40 = scmp.ne.s32.totalorder %s29, %s32
      %p41 = scmp.eq.s32.totalorder %s24, 3
      %p42 = por %p40, %p41
      %p43 = scmp.ne.s32.totalorder %s32, %s33
      %p44 = scmp.eq.s32.totalorder %s24, 0
      %p45 = por %p43, %p44
      %p46 = scmp.ne.s32.totalorder %s32, %s33
      %p47 = scmp.eq.s32.totalorder %s25, 3
      %p48 = por %p46, %p47
      %p50 = scmp.ne.s32.totalorder %s33, %s49
      %p51 = scmp.eq.s32.totalorder %s25, 0
      %p52 = por %p50, %p51
      %s53 = ssub.s32 %s19, %s26
      %p54 = scmp.eq.s32.totalorder %s53, 0
      %s56 = sadd.s32 %s55, 1
      %s57 = scalar_select %p54, %s55, %s56
      %p60 = pneg %p54
      %p61 = scmp.eq.s32.totalorder %s19, 3
      %p62 = por %p60, %p61
      %p63 = scmp.ne.s32.totalorder %s55, %s58
      %p64 = scmp.eq.s32.totalorder %s19, 0
      %p65 = por %p63, %p64
      %p66 = scmp.ne.s32.totalorder %s55, %s58
      %p67 = scmp.eq.s32.totalorder %s24, 3
      %p68 = por %p66, %p67
      %p69 = scmp.ne.s32.totalorder %s58, %s59
      %p70 = scmp.eq.s32.totalorder %s24, 0
      %p71 = por %p69, %p70
      %p72 = scmp.ne.s32.totalorder %s58, %s59
      %p73 = scmp.eq.s32.totalorder %s25, 3
      %p74 = por %p72, %p73
      %p76 = scmp.ne.s32.totalorder %s59, %s75
      %p77 = scmp.eq.s32.totalorder %s25, 0
      %p78 = por %p76, %p77
      %s79 = ssub.s32 %s19, %s26
      %p80 = scmp.eq.s32.totalorder %s79, 0
      %s82 = sadd.s32 %s81, 1
      %s83 = scalar_select %p80, %s81, %s82
      %p86 = pneg %p80
      %p87 = scmp.eq.s32.totalorder %s19, 3
      %p88 = por %p86, %p87
      %p89 = scmp.ne.s32.totalorder %s81, %s84
      %p90 = scmp.eq.s32.totalorder %s19, 0
      %p91 = por %p89, %p90
      %p92 = scmp.ne.s32.totalorder %s81, %s84
      %p93 = scmp.eq.s32.totalorder %s24, 3
      %p94 = por %p92, %p93
      %p95 = scmp.ne.s32.totalorder %s84, %s85
      %p96 = scmp.eq.s32.totalorder %s24, 0
      %p97 = por %p95, %p96
      %p98 = scmp.ne.s32.totalorder %s84, %s85
      %p99 = scmp.eq.s32.totalorder %s25, 3
      %p100 = por %p98, %p99
      %p102 = scmp.ne.s32.totalorder %s85, %s101
      %p103 = scmp.eq.s32.totalorder %s25, 0
      %p104 = por %p102, %p103
      %s106 = sadd.s32 %s105, 1
      %p109 = scmp.eq.s32.totalorder %s19, 3
      %p110 = scmp.ne.s32.totalorder %s105, %s107
      %p111 = scmp.eq.s32.totalorder %s19, 0
      %p112 = por %p110, %p111
      %p113 = scmp.ne.s32.totalorder %s105, %s107
      %p114 = scmp.eq.s32.totalorder %s24, 3
      %p115 = por %p113, %p114
      %p116 = scmp.ne.s32.totalorder %s107, %s108
      %p117 = scmp.eq.s32.totalorder %s24, 0
      %p118 = por %p116, %p117
      %p119 = scmp.ne.s32.totalorder %s107, %s108
      %p120 = scmp.eq.s32.totalorder %s25, 3
      %p121 = por %p119, %p120
      %p123 = scmp.ne.s32.totalorder %s108, %s122
      %p124 = scmp.eq.s32.totalorder %s25, 0
      %p125 = por %p123, %p124
      %s127 = sadd.s32 %s126, 1
      %p130 = scmp.eq.s32.totalorder %s19, 3
      %p131 = scmp.ne.s32.totalorder %s126, %s128
      %p132 = scmp.eq.s32.totalorder %s19, 0
      %p133 = por %p131, %p132
      %p134 = scmp.ne.s32.totalorder %s126, %s128
      %p135 = scmp.eq.s32.totalorder %s24, 3
      %p136 = por %p134, %p135
      %p137 = scmp.ne.s32.totalorder %s128, %s129
      %p138 = scmp.eq.s32.totalorder %s24, 0
      %p139 = por %p137, %p138
      %p140 = scmp.ne.s32.totalorder %s128, %s129
      %p141 = scmp.eq.s32.totalorder %s25, 3
      %p142 = por %p140, %p141
      %p144 = scmp.ne.s32.totalorder %s129, %s143
      %p145 = scmp.eq.s32.totalorder %s25, 0
      %p146 = por %p144, %p145
      %s148 = sadd.s32 %s147, 1
      %p151 = scmp.eq.s32.totalorder %s19, 3
      %p152 = scmp.ne.s32.totalorder %s147, %s149
      %p153 = scmp.eq.s32.totalorder %s19, 0
      %p154 = por %p152, %p153
      %p155 = scmp.ne.s32.totalorder %s147, %s149
      %p156 = scmp.eq.s32.totalorder %s24, 3
      %p157 = por %p155, %p156
      %p158 = scmp.ne.s32.totalorder %s149, %s150
      %p159 = scmp.eq.s32.totalorder %s24, 0
      %p160 = por %p158, %p159
      %p161 = scmp.ne.s32.totalorder %s149, %s150
      %p162 = scmp.eq.s32.totalorder %s25, 3
      %p163 = por %p161, %p162
      %p165 = scmp.ne.s32.totalorder %s150, %s164
      %p166 = scmp.eq.s32.totalorder %s25, 0
      %p167 = por %p165, %p166
      %s169 = sadd.s32 %s168, 1
      %p172 = scmp.eq.s32.totalorder %s19, 3
      %p173 = scmp.ne.s32.totalorder %s168, %s170
      %p174 = scmp.eq.s32.totalorder %s19, 0
      %p175 = por %p173, %p174
      %p176 = scmp.ne.s32.totalorder %s168, %s170
      %p177 = scmp.eq.s32.totalorder %s24, 3
      %p178 = por %p176, %p177
      %p179 = scmp.ne.s32.totalorder %s170, %s171
      %p180 = scmp.eq.s32.totalorder %s24, 0
      %p181 = por %p179, %p180
      %p182 = scmp.ne.s32.totalorder %s170, %s171
      %p183 = scmp.eq.s32.totalorder %s25, 3
      %p184 = por %p182, %p183
      %p186 = scmp.ne.s32.totalorder %s171, %s185
      %p187 = scmp.eq.s32.totalorder %s25, 0
      %p188 = por %p186, %p187
      %s190 = sadd.s32 %s189, 1
      %p193 = scmp.eq.s32.totalorder %s19, 3
      %p194 = scmp.ne.s32.totalorder %s189, %s191
      %p195 = scmp.eq.s32.totalorder %s19, 0
      %p196 = por %p194, %p195
      %p197 = scmp.ne.s32.totalorder %s189, %s191
      %p198 = scmp.eq.s32.totalorder %s24, 3
      %p199 = por %p197, %p198
      %p200 = scmp.ne.s32.totalorder %s191, %s192
      %p201 = scmp.eq.s32.totalorder %s24, 0
      %p202 = por %p200, %p201
      %p203 = scmp.ne.s32.totalorder %s191, %s192
      %p204 = scmp.eq.s32.totalorder %s25, 3
      %p205 = por %p203, %p204
      %p207 = scmp.ne.s32.totalorder %s192, %s206
      %p208 = scmp.eq.s32.totalorder %s25, 0
      %p209 = por %p207, %p208
      %s210 = ssub.s32 %s19, %s26
      %p211 = scmp.eq.s32.totalorder %s210, 0
      %s213 = sadd.s32 %s212, 1
      %s214 = scalar_select %p211, %s212, %s213
      %p217 = pneg %p211
      %p218 = scmp.eq.s32.totalorder %s19, 3
      %p219 = por %p217, %p218
      %p220 = scmp.ne.s32.totalorder %s212, %s215
      %p221 = scmp.eq.s32.totalorder %s19, 0
      %p222 = por %p220, %p221
      %p223 = scmp.ne.s32.totalorder %s212, %s215
      %p224 = scmp.eq.s32.totalorder %s24, 3
      %p225 = por %p223, %p224
      %p226 = scmp.ne.s32.totalorder %s215, %s216
      %p227 = scmp.eq.s32.totalorder %s24, 0
      %p228 = por %p226, %p227
      %p229 = scmp.ne.s32.totalorder %s215, %s216
      %p230 = scmp.eq.s32.totalorder %s25, 3
      %p231 = por %p229, %p230
      %p233 = scmp.ne.s32.totalorder %s216, %s232
      %p234 = scmp.eq.s32.totalorder %s25, 0
      %p235 = por %p233, %p234
      %s236 = ssub.s32 %s19, %s26
      %p237 = scmp.eq.s32.totalorder %s236, 0
      %s239 = sadd.s32 %s238, 1
      %s240 = scalar_select %p237, %s238, %s239
      %p243 = pneg %p237
      %p244 = scmp.eq.s32.totalorder %s19, 3
      %p245 = por %p243, %p244
      %p246 = scmp.ne.s32.totalorder %s238, %s241
      %p247 = scmp.eq.s32.totalorder %s19, 0
      %p248 = por %p246, %p247
      %p249 = scmp.ne.s32.totalorder %s238, %s241
      %p250 = scmp.eq.s32.totalorder %s24, 3
      %p251 = por %p249, %p250
      %p252 = scmp.ne.s32.totalorder %s241, %s242
      %p253 = scmp.eq.s32.totalorder %s24, 0
      %p254 = por %p252, %p253
      %p255 = scmp.ne.s32.totalorder %s241, %s242
      %p256 = scmp.eq.s32.totalorder %s25, 3
      %p257 = por %p255, %p256
      %p259 = scmp.ne.s32.totalorder %s242, %s258
      %p260 = scmp.eq.s32.totalorder %s25, 0
      %p261 = por %p259, %p260
      %p262 = scmp.le.s32.totalorder 1, %s19
      %p263 = scmp.lt.s32.totalorder %s19, 5
      %p264 = pnand %p262, %p263
      %p265 = pneg %p264
      // Predicated region
      $region9: #{gcc_forward_batched.1} parent=5 // pred_check
        _
      $region10: #{gcc_forward_batched.1} parent=5 // pred_check_branch
        %267 = sbr.rel (%p264) target = $region12
      $region11: #{gcc_forward_batched.1} parent=5 // pred_region
        %s268 = ssub.s32 %s19, 1
        // Predicated region
        $region13: #{gcc_forward_batched.1} parent=11 // pred_check
          %p269 = pneg %p118
        $region14: #{gcc_forward_batched.1} parent=11 // pred_check_branch
          %271 = sbr.rel (%p269) target = $region16
        $region15: #{gcc_forward_batched.1} parent=11 // pred_region
          _
        $region16: #{gcc_forward_batched.1} parent=11 // pred_fallthru
          _
        // Predicated region
        $region17: #{gcc_forward_batched.1} parent=11 // pred_check
          %p272 = pneg %p139
        $region18: #{gcc_forward_batched.1} parent=11 // pred_check_branch
          %274 = sbr.rel (%p272) target = $region20
        $region19: #{gcc_forward_batched.1} parent=11 // pred_region
          _
        $region20: #{gcc_forward_batched.1} parent=11 // pred_fallthru
          _
        // Predicated region
        $region21: #{gcc_forward_batched.1} parent=11 // pred_check
          %p275 = pneg %p160
        $region22: #{gcc_forward_batched.1} parent=11 // pred_check_branch
          %277 = sbr.rel (%p275) target = $region24
        $region23: #{gcc_forward_batched.1} parent=11 // pred_region
          _
        $region24: #{gcc_forward_batched.1} parent=11 // pred_fallthru
          _
        // Predicated region
        $region25: #{gcc_forward_batched.1} parent=11 // pred_check
          %p278 = pneg %p181
        $region26: #{gcc_forward_batched.1} parent=11 // pred_check_branch
          %280 = sbr.rel (%p278) target = $region28
        $region27: #{gcc_forward_batched.1} parent=11 // pred_region
          _
        $region28: #{gcc_forward_batched.1} parent=11 // pred_fallthru
          _
        // Predicated region
        $region29: #{gcc_forward_batched.1} parent=11 // pred_check
          %p281 = pneg %p202
        $region30: #{gcc_forward_batched.1} parent=11 // pred_check_branch
          %283 = sbr.rel (%p281) target = $region32
        $region31: #{gcc_forward_batched.1} parent=11 // pred_region
          _
        $region32: #{gcc_forward_batched.1} parent=11 // pred_fallthru
          _
      $region12: #{gcc_forward_batched.1} parent=5 // pred_fallthru
        _
      %p284 = scmp.lt.s32.totalorder %s19, 4
      // Predicated region
      $region33: #{gcc_forward_batched.1} parent=5 // pred_check
        %p285 = pneg %p284
      $region34: #{gcc_forward_batched.1} parent=5 // pred_check_branch
        %287 = sbr.rel (%p285) target = $region36
      $region35: #{gcc_forward_batched.1} parent=5 // pred_region
        // Predicated region
        $region37: #{gcc_forward_batched.1} parent=35 // pred_check
          %p288 = pneg %p39
        $region38: #{gcc_forward_batched.1} parent=35 // pred_check_branch
          %290 = sbr.rel (%p288) target = $region40
        $region39: #{gcc_forward_batched.1} parent=35 // pred_region
          %p291 = scmp.lt.s32.totalorder %s19, 3
          %s292 = scalar_select %p291, %s19, 3
          %s293 = smul.addr %s292, 16
          %s294 = smul.addr %s293, 4
          %s295 = scalar_lea.vmem %s0, %s294
        $region40: #{gcc_forward_batched.1} parent=35 // pred_fallthru
          _
        // Predicated region
        $region41: #{gcc_forward_batched.1} parent=35 // pred_check
          %p296 = pneg %p65
        $region42: #{gcc_forward_batched.1} parent=35 // pred_check_branch
          %298 = sbr.rel (%p296) target = $region44
        $region43: #{gcc_forward_batched.1} parent=35 // pred_region
          %p299 = scmp.lt.s32.totalorder %s19, 3
          %s300 = scalar_select %p299, %s19, 3
          %s301 = smul.addr %s300, 16
          %s302 = smul.addr %s301, 8
          %s303 = scalar_lea.vmem %s1, %s302
        $region44: #{gcc_forward_batched.1} parent=35 // pred_fallthru
          _
        // Predicated region
        $region45: #{gcc_forward_batched.1} parent=35 // pred_check
          %p304 = pneg %p91
        $region46: #{gcc_forward_batched.1} parent=35 // pred_check_branch
          %306 = sbr.rel (%p304) target = $region48
        $region47: #{gcc_forward_batched.1} parent=35 // pred_region
          %p307 = scmp.lt.s32.totalorder %s19, 3
          %s308 = scalar_select %p307, %s19, 3
          %s309 = smul.addr %s308, 16
          %s310 = smul.addr %s309, 4
          %s311 = scalar_lea.vmem %s2, %s310
        $region48: #{gcc_forward_batched.1} parent=35 // pred_fallthru
          _
      $region36: #{gcc_forward_batched.1} parent=5 // pred_fallthru
        _
      %p312 = scmp.le.s32.totalorder 1, %s19
      %p313 = scmp.lt.s32.totalorder %s19, 5
      %p314 = pnand %p312, %p313
      %p315 = pneg %p314
      // Predicated region
      $region49: #{gcc_forward_batched.1} parent=5 // pred_check
        _
      $region50: #{gcc_forward_batched.1} parent=5 // pred_check_branch
        %317 = sbr.rel (%p314) target = $region52
      $region51: #{gcc_forward_batched.1} parent=5 // pred_region
        %s318 = ssub.s32 %s19, 1
        %p319 = scmp.lt.s32.totalorder %s24, 3
        %s320 = scalar_select %p319, %s24, 3
        %s321 = smul.addr %s320, 16
        %s322 = smul.addr %s321, 4
        %s323 = scalar_lea.vmem %s0, %s322
        %p324 = pneg %p45
        %p325 = pneg %p42
        %p326 = scmp.lt.s32.totalorder %s24, 3
        %s327 = scalar_select %p326, %s24, 3
        %s328 = smul.addr %s327, 16
        %s329 = smul.addr %s328, 8
        %s330 = scalar_lea.vmem %s1, %s329
        %p331 = pneg %p71
        %p332 = pneg %p68
        %p333 = scmp.lt.s32.totalorder %s24, 3
        %s334 = scalar_select %p333, %s24, 3
        %s335 = smul.addr %s334, 16
        %s336 = smul.addr %s335, 4
        %s337 = scalar_lea.vmem %s2, %s336
        %p338 = pneg %p97
        %p339 = pneg %p94
        %p340 = pneg %p118
        %p341 = pneg %p115
        %p342 = pneg %p139
        %p343 = pneg %p136
        %p344 = pneg %p160
        %p345 = pneg %p157
        %p346 = pneg %p181
        %p347 = pneg %p178
        %p348 = pneg %p202
        %p349 = pneg %p199
        %p350 = pneg %p228
        %p351 = pneg %p225
        %p352 = scmp.lt.s32.totalorder %s24, 3
        %s353 = scalar_select %p352, %s24, 3
        %s354 = smul.addr %s353, 16
        %s355 = smul.addr %s354, 8
        %s356 = scalar_lea.vmem %s8, %s355
        %p357 = pneg %p254
        %p358 = pneg %p251
        %s359 = sand.u32 %s241, 1
        %s360 = scalar_lea.sflag [#allocation3], %s359
        %s361 = sand.u32 %s241, 1
        %s362 = scalar_lea.vmem [#allocation2], %s361
        %p363 = scmp.lt.s32.totalorder %s24, 3
        %s364 = scalar_select %p363, %s24, 3
        %s365 = smul.addr %s364, 16
        %s366 = smul.addr %s365, 4
        %s367 = scalar_lea.vmem %s0, %s366
        %p368 = scmp.lt.s32.totalorder %s24, 3
        %s369 = scalar_select %p368, %s24, 3
        %s370 = smul.addr %s369, 16
        %s371 = smul.addr %s370, 8
        %s372 = scalar_lea.vmem %s1, %s371
        %p373 = scmp.lt.s32.totalorder %s24, 3
        %s374 = scalar_select %p373, %s24, 3
        %s375 = smul.addr %s374, 16
        %s376 = smul.addr %s375, 4
        %s377 = scalar_lea.vmem %s2, %s376
        %p378 = scmp.lt.s32.totalorder %s24, 3
        %s379 = scalar_select %p378, %s24, 3
        %s380 = smul.addr %s379, 16
        %s381 = smul.addr %s380, 8
        %s382 = scalar_lea.vmem %s8, %s381
        %v384 = vld [vmem:[%s367] sm:$0xf]
        %v385 = vld [vmem:[%s367 + $0x4] sm:$0xf]
        %v386 = vld [vmem:[%s367 + $0x8] sm:$0xf]
        %v387 = vld [vmem:[%s367 + $0xc] sm:$0xf]
        %v388 = vld [vmem:[%s367 + $0x10] sm:$0xf]
        %v389 = vld [vmem:[%s367 + $0x14] sm:$0xf]
        %v390 = vld [vmem:[%s367 + $0x18] sm:$0xf]
        %v391 = vld [vmem:[%s367 + $0x1c] sm:$0xf]
        %v392 = vld [vmem:[%s367 + $0x20] sm:$0xf]
        %v393 = vld [vmem:[%s367 + $0x24] sm:$0xf]
        %v394 = vld [vmem:[%s367 + $0x28] sm:$0xf]
        %v395 = vld [vmem:[%s367 + $0x2c] sm:$0xf]
        %v396 = vld [vmem:[%s367 + $0x30] sm:$0xf]
        %v397 = vld [vmem:[%s367 + $0x34] sm:$0xf]
        %v398 = vld [vmem:[%s367 + $0x38] sm:$0xf]
        %v399 = vld [vmem:[%s367 + $0x3c] sm:$0xf]
        %v400 = vld [vmem:[%s372] sm:$0xff]
        %v401 = vld [vmem:[%s372 + $0x8] sm:$0xff]
        %v402 = vld [vmem:[%s372 + $0x10] sm:$0xff]
        %v403 = vld [vmem:[%s372 + $0x18] sm:$0xff]
        %v404 = vld [vmem:[%s372 + $0x20] sm:$0xff]
        %v405 = vld [vmem:[%s372 + $0x28] sm:$0xff]
        %v406 = vld [vmem:[%s372 + $0x30] sm:$0xff]
        %v407 = vld [vmem:[%s372 + $0x38] sm:$0xff]
        %v408 = vld [vmem:[%s372 + $0x40] sm:$0xff]
        %v409 = vld [vmem:[%s372 + $0x48] sm:$0xff]
        %v410 = vld [vmem:[%s372 + $0x50] sm:$0xff]
        %v411 = vld [vmem:[%s372 + $0x58] sm:$0xff]
        %v412 = vld [vmem:[%s372 + $0x60] sm:$0xff]
        %v413 = vld [vmem:[%s372 + $0x68] sm:$0xff]
        %v414 = vld [vmem:[%s372 + $0x70] sm:$0xff]
        %v415 = vld [vmem:[%s372 + $0x78] sm:$0xff]
        %v416 = vld [vmem:[%s377] sm:$0xf]
        %v417 = vld [vmem:[%s377 + $0x4] sm:$0xf]
        %v418 = vld [vmem:[%s377 + $0x8] sm:$0xf]
        %v419 = vld [vmem:[%s377 + $0xc] sm:$0xf]
        %v420 = vld [vmem:[%s377 + $0x10] sm:$0xf]
        %v421 = vld [vmem:[%s377 + $0x14] sm:$0xf]
        %v422 = vld [vmem:[%s377 + $0x18] sm:$0xf]
        %v423 = vld [vmem:[%s377 + $0x1c] sm:$0xf]
        %v424 = vld [vmem:[%s377 + $0x20] sm:$0xf]
        %v425 = vld [vmem:[%s377 + $0x24] sm:$0xf]
        %v426 = vld [vmem:[%s377 + $0x28] sm:$0xf]
        %v427 = vld [vmem:[%s377 + $0x2c] sm:$0xf]
        %v428 = vld [vmem:[%s377 + $0x30] sm:$0xf]
        %v429 = vld [vmem:[%s377 + $0x34] sm:$0xf]
        %v430 = vld [vmem:[%s377 + $0x38] sm:$0xf]
        %v431 = vld [vmem:[%s377 + $0x3c] sm:$0xf]
        %v432 = vld [vmem:[%s3] sm:$0xf]
        %v433 = vld [vmem:[%s3 + $0x4] sm:$0xf]
        %v434 = vld [vmem:[%s3 + $0x8] sm:$0xf]
        %v435 = vld [vmem:[%s3 + $0xc] sm:$0xf]
        %v436 = vld [vmem:[%s3 + $0x10] sm:$0xf]
        %v437 = vld [vmem:[%s3 + $0x14] sm:$0xf]
        %v438 = vld [vmem:[%s3 + $0x18] sm:$0xf]
        %v439 = vld [vmem:[%s3 + $0x1c] sm:$0xf]
        %v440 = vld [vmem:[%s3 + $0x20] sm:$0xf]
        %v441 = vld [vmem:[%s3 + $0x24] sm:$0xf]
        %v442 = vld [vmem:[%s3 + $0x28] sm:$0xf]
        %v443 = vld [vmem:[%s3 + $0x2c] sm:$0xf]
        %v444 = vld [vmem:[%s3 + $0x30] sm:$0xf]
        %v445 = vld [vmem:[%s3 + $0x34] sm:$0xf]
        %v446 = vld [vmem:[%s3 + $0x38] sm:$0xf]
        %v447 = vld [vmem:[%s3 + $0x3c] sm:$0xf]
        %v464 = vunpack.c.l.b16 %v416
        %v465 = vunpack.c.l.b16 %v417
        %v466 = vunpack.c.l.b16 %v418
        %v467 = vunpack.c.l.b16 %v419
        %v468 = vunpack.c.l.b16 %v420
        %v469 = vunpack.c.l.b16 %v421
        %v470 = vunpack.c.l.b16 %v422
        %v471 = vunpack.c.l.b16 %v423
        %v472 = vunpack.c.l.b16 %v424
        %v473 = vunpack.c.l.b16 %v425
        %v474 = vunpack.c.l.b16 %v426
        %v475 = vunpack.c.l.b16 %v427
        %v476 = vunpack.c.l.b16 %v428
        %v477 = vunpack.c.l.b16 %v429
        %v478 = vunpack.c.l.b16 %v430
        %v479 = vunpack.c.l.b16 %v431
        %v480 = vpack.c.b16 %v465, %v464
        %v481 = vpack.c.b16 %v467, %v466
        %v482 = vpack.c.b16 %v469, %v468
        %v483 = vpack.c.b16 %v471, %v470
        %v484 = vpack.c.b16 %v473, %v472
        %v485 = vpack.c.b16 %v475, %v474
        %v486 = vpack.c.b16 %v477, %v476
        %v487 = vpack.c.b16 %v479, %v478
        %v512 = vunpack.c.l.b16 %v432
        %v513 = vunpack.c.l.b16 %v433
        %v514 = vunpack.c.l.b16 %v434
        %v515 = vunpack.c.l.b16 %v435
        %v516 = vunpack.c.l.b16 %v436
        %v517 = vunpack.c.l.b16 %v437
        %v518 = vunpack.c.l.b16 %v438
        %v519 = vunpack.c.l.b16 %v439
        %v520 = vunpack.c.l.b16 %v440
        %v521 = vunpack.c.l.b16 %v441
        %v522 = vunpack.c.l.b16 %v442
        %v523 = vunpack.c.l.b16 %v443
        %v524 = vunpack.c.l.b16 %v444
        %v525 = vunpack.c.l.b16 %v445
        %v526 = vunpack.c.l.b16 %v446
        %v527 = vunpack.c.l.b16 %v447
        %v528 = vpack.c.b16 %v513, %v512
        %v529 = vpack.c.b16 %v515, %v514
        %v530 = vpack.c.b16 %v517, %v516
        %v531 = vpack.c.b16 %v519, %v518
        %v532 = vpack.c.b16 %v521, %v520
        %v533 = vpack.c.b16 %v523, %v522
        %v534 = vpack.c.b16 %v525, %v524
        %v535 = vpack.c.b16 %v527, %v526
        %544 = vmatprep.subr.bf16.mxu0 0
        %545 = vmatpush1.bf16.msra.mxu0 %v528
        %546 = vmatprep.subr.bf16.mxu0 0
        %547 = vmatpush1.bf16.msra.mxu0 %v529
        %548 = vmatprep.subr.bf16.mxu0 0
        %549 = vmatpush1.bf16.msra.mxu0 %v530
        %550 = vmatprep.subr.bf16.mxu0 0
        %551 = vmatpush1.bf16.msra.mxu0 %v531
        %552 = vmatprep.subr.bf16.mxu0 0
        %553 = vmatpush1.bf16.msra.mxu0 %v532
        %554 = vmatprep.subr.bf16.mxu0 0
        %555 = vmatpush1.bf16.msra.mxu0 %v533
        %556 = vmatprep.subr.bf16.mxu0 0
        %557 = vmatpush1.bf16.msra.mxu0 %v534
        %558 = vmatprep.subr.bf16.mxu0 0
        %559 = vmatpush1.bf16.msra.mxu0 %v535
        %560 = vmatprep.subr.bf16.mxu0 0
        %561 = vmatpush1.bf16.msra.mxu0 0
        %562 = vmatprep.subr.bf16.mxu0 0
        %563 = vmatpush1.bf16.msra.mxu0 0
        %564 = vmatprep.subr.bf16.mxu0 0
        %565 = vmatpush1.bf16.msra.mxu0 0
        %566 = vmatprep.subr.bf16.mxu0 0
        %567 = vmatpush1.bf16.msra.mxu0 0
        %568 = vmatprep.subr.bf16.mxu0 0
        %569 = vmatpush1.bf16.msra.mxu0 0
        %570 = vmatprep.subr.bf16.mxu0 0
        %571 = vmatpush1.bf16.msra.mxu0 0
        %572 = vmatprep.subr.bf16.mxu0 0
        %573 = vmatpush1.bf16.msra.mxu0 0
        %574 = vmatprep.subr.bf16.mxu0 0
        %575 = vmatpush1.bf16.msra.mxu0 0
        %576 = vmatprep.mubr.bf16.mxu0 0
        %577 = vmatmul.mubr.bf16.gmra.mrb[0].mxu0 %v480
        %v578 = vpop.f32.mrb[0].mxu0
        %v579 = vadd.f32 0.0, %v578
        %v580 = vpop.f32.mrb[0].mxu0
        %v581 = vpop.f32.mrb[0].mxu0
        %v582 = vadd.f32 0.0, %v581
        %v583 = vpop.f32.mrb[0].mxu0
        %584 = vmatprep.mubr.bf16.mxu0 0
        %585 = vmatmul.mubr.bf16.gmra.mrb[0].mxu0 %v481
        %v586 = vpop.f32.mrb[0].mxu0
        %v587 = vadd.f32 0.0, %v586
        %v588 = vpop.f32.mrb[0].mxu0
        %v589 = vpop.f32.mrb[0].mxu0
        %v590 = vadd.f32 0.0, %v589
        %v591 = vpop.f32.mrb[0].mxu0
        %592 = vmatprep.mubr.bf16.mxu0 0
        %593 = vmatmul.mubr.bf16.gmra.mrb[0].mxu0 %v482
        %v594 = vpop.f32.mrb[0].mxu0
        %v595 = vadd.f32 0.0, %v594
        %v596 = vpop.f32.mrb[0].mxu0
        %v597 = vpop.f32.mrb[0].mxu0
        %v598 = vadd.f32 0.0, %v597
        %v599 = vpop.f32.mrb[0].mxu0
        %600 = vmatprep.mubr.bf16.mxu0 0
        %601 = vmatmul.mubr.bf16.gmra.mrb[0].mxu0 %v483
        %v602 = vpop.f32.mrb[0].mxu0
        %v603 = vadd.f32 0.0, %v602
        %v604 = vpop.f32.mrb[0].mxu0
        %v605 = vpop.f32.mrb[0].mxu0
        %v606 = vadd.f32 0.0, %v605
        %v607 = vpop.f32.mrb[0].mxu0
        %608 = vmatprep.mubr.bf16.mxu0 0
        %609 = vmatmul.mubr.bf16.gmra.mrb[0].mxu0 %v484
        %v610 = vpop.f32.mrb[0].mxu0
        %v611 = vadd.f32 0.0, %v610
        %v612 = vpop.f32.mrb[0].mxu0
        %v613 = vpop.f32.mrb[0].mxu0
        %v614 = vadd.f32 0.0, %v613
        %v615 = vpop.f32.mrb[0].mxu0
        %616 = vmatprep.mubr.bf16.mxu0 0
        %617 = vmatmul.mubr.bf16.gmra.mrb[0].mxu0 %v485
        %v618 = vpop.f32.mrb[0].mxu0
        %v619 = vadd.f32 0.0, %v618
        %v620 = vpop.f32.mrb[0].mxu0
        %v621 = vpop.f32.mrb[0].mxu0
        %v622 = vadd.f32 0.0, %v621
        %v623 = vpop.f32.mrb[0].mxu0
        %624 = vmatprep.mubr.bf16.mxu0 0
        %625 = vmatmul.mubr.bf16.gmra.mrb[0].mxu0 %v486
        %v626 = vpop.f32.mrb[0].mxu0
        %v627 = vadd.f32 0.0, %v626
        %v628 = vpop.f32.mrb[0].mxu0
        %v629 = vpop.f32.mrb[0].mxu0
        %v630 = vadd.f32 0.0, %v629
        %v631 = vpop.f32.mrb[0].mxu0
        %632 = vmatprep.mubr.bf16.mxu0 0
        %633 = vmatmul.mubr.bf16.gmra.mrb[0].mxu0 %v487
        %v634 = vpop.f32.mrb[0].mxu0
        %v635 = vadd.f32 0.0, %v634
        %v636 = vpop.f32.mrb[0].mxu0
        %v637 = vpop.f32.mrb[0].mxu0
        %v638 = vadd.f32 0.0, %v637
        %v639 = vpop.f32.mrb[0].mxu0
        %640 = vdwg.mxu0
        %642 = vset.pattern.permute.xlu0 0
        %643 = vperm.xlu0 %642, %v400
        %v644 = vpop.permute.xlu0 %643
        %647 = vset.pattern.permute.xlu0 0
        %648 = vperm.xlu0 %647, %v401
        %v649 = vpop.permute.xlu0 %648
        %652 = vset.pattern.permute.xlu0 0
        %653 = vperm.xlu0 %652, %v402
        %v654 = vpop.permute.xlu0 %653
        %657 = vset.pattern.permute.xlu0 0
        %658 = vperm.xlu0 %657, %v403
        %v659 = vpop.permute.xlu0 %658
        %662 = vset.pattern.permute.xlu0 0
        %663 = vperm.xlu0 %662, %v404
        %v664 = vpop.permute.xlu0 %663
        %667 = vset.pattern.permute.xlu0 0
        %668 = vperm.xlu0 %667, %v405
        %v669 = vpop.permute.xlu0 %668
        %672 = vset.pattern.permute.xlu0 0
        %673 = vperm.xlu0 %672, %v406
        %v674 = vpop.permute.xlu0 %673
        %677 = vset.pattern.permute.xlu0 0
        %678 = vperm.xlu0 %677, %v407
        %v679 = vpop.permute.xlu0 %678
        %682 = vset.pattern.permute.xlu0 0
        %683 = vperm.xlu0 %682, %v408
        %v684 = vpop.permute.xlu0 %683
        %687 = vset.pattern.permute.xlu0 0
        %688 = vperm.xlu0 %687, %v409
        %v689 = vpop.permute.xlu0 %688
        %692 = vset.pattern.permute.xlu0 0
        %693 = vperm.xlu0 %692, %v410
        %v694 = vpop.permute.xlu0 %693
        %697 = vset.pattern.permute.xlu0 0
        %698 = vperm.xlu0 %697, %v411
        %v699 = vpop.permute.xlu0 %698
        %702 = vset.pattern.permute.xlu0 0
        %703 = vperm.xlu0 %702, %v412
        %v704 = vpop.permute.xlu0 %703
        %707 = vset.pattern.permute.xlu0 0
        %708 = vperm.xlu0 %707, %v413
        %v709 = vpop.permute.xlu0 %708
        %712 = vset.pattern.permute.xlu0 0
        %713 = vperm.xlu0 %712, %v414
        %v714 = vpop.permute.xlu0 %713
        %717 = vset.pattern.permute.xlu0 0
        %718 = vperm.xlu0 %717, %v415
        %v719 = vpop.permute.xlu0 %718
        %v721 = vmul.f32 %v644, %v579
        %v722 = vmul.f32 %v649, %v582
        %v723 = vmul.f32 %v654, %v587
        %v724 = vmul.f32 %v659, %v590
        %v725 = vmul.f32 %v664, %v595
        %v726 = vmul.f32 %v669, %v598
        %v727 = vmul.f32 %v674, %v603
        %v728 = vmul.f32 %v679, %v606
        %v729 = vmul.f32 %v684, %v611
        %v730 = vmul.f32 %v689, %v614
        %v731 = vmul.f32 %v694, %v619
        %v732 = vmul.f32 %v699, %v622
        %v733 = vmul.f32 %v704, %v627
        %v734 = vmul.f32 %v709, %v630
        %v735 = vmul.f32 %v714, %v635
        %v736 = vmul.f32 %v719, %v638
        %v737 = vpack.c.bf16 %v722, %v721
        %v738 = vpack.c.bf16 %v724, %v723
        %v739 = vpack.c.bf16 %v726, %v725
        %v740 = vpack.c.bf16 %v728, %v727
        %v741 = vpack.c.bf16 %v730, %v729
        %v742 = vpack.c.bf16 %v732, %v731
        %v743 = vpack.c.bf16 %v734, %v733
        %v744 = vpack.c.bf16 %v736, %v735
        %v761 = vunpack.c.l.b16 %v384
        %v762 = vunpack.c.l.b16 %v385
        %v763 = vunpack.c.l.b16 %v386
        %v764 = vunpack.c.l.b16 %v387
        %v765 = vunpack.c.l.b16 %v388
        %v766 = vunpack.c.l.b16 %v389
        %v767 = vunpack.c.l.b16 %v390
        %v768 = vunpack.c.l.b16 %v391
        %v769 = vunpack.c.l.b16 %v392
        %v770 = vunpack.c.l.b16 %v393
        %v771 = vunpack.c.l.b16 %v394
        %v772 = vunpack.c.l.b16 %v395
        %v773 = vunpack.c.l.b16 %v396
        %v774 = vunpack.c.l.b16 %v397
        %v775 = vunpack.c.l.b16 %v398
        %v776 = vunpack.c.l.b16 %v399
        %v777 = vpack.c.b16 %v762, %v761
        %v778 = vpack.c.b16 %v764, %v763
        %v779 = vpack.c.b16 %v766, %v765
        %v780 = vpack.c.b16 %v768, %v767
        %v781 = vpack.c.b16 %v770, %v769
        %v782 = vpack.c.b16 %v772, %v771
        %v783 = vpack.c.b16 %v774, %v773
        %v784 = vpack.c.b16 %v776, %v775
        %793 = vmatprep.subr.bf16.mxu0 0
        %794 = vmatpush1.bf16.msra.mxu0 %v737
        %795 = vmatprep.subr.bf16.mxu0 0
        %796 = vmatpush1.bf16.msra.mxu0 %v738
        %797 = vmatprep.subr.bf16.mxu0 0
        %798 = vmatpush1.bf16.msra.mxu0 %v739
        %799 = vmatprep.subr.bf16.mxu0 0
        %800 = vmatpush1.bf16.msra.mxu0 %v740
        %801 = vmatprep.subr.bf16.mxu0 0
        %802 = vmatpush1.bf16.msra.mxu0 %v741
        %803 = vmatprep.subr.bf16.mxu0 0
        %804 = vmatpush1.bf16.msra.mxu0 %v742
        %805 = vmatprep.subr.bf16.mxu0 0
        %806 = vmatpush1.bf16.msra.mxu0 %v743
        %807 = vmatprep.subr.bf16.mxu0 0
        %808 = vmatpush1.bf16.msra.mxu0 %v744
        %809 = vmatprep.subr.bf16.mxu0 0
        %810 = vmatpush1.bf16.msra.mxu0 0
        %811 = vmatprep.subr.bf16.mxu0 0
        %812 = vmatpush1.bf16.msra.mxu0 0
        %813 = vmatprep.subr.bf16.mxu0 0
        %814 = vmatpush1.bf16.msra.mxu0 0
        %815 = vmatprep.subr.bf16.mxu0 0
        %816 = vmatpush1.bf16.msra.mxu0 0
        %817 = vmatprep.subr.bf16.mxu0 0
        %818 = vmatpush1.bf16.msra.mxu0 0
        %819 = vmatprep.subr.bf16.mxu0 0
        %820 = vmatpush1.bf16.msra.mxu0 0
        %821 = vmatprep.subr.bf16.mxu0 0
        %822 = vmatpush1.bf16.msra.mxu0 0
        %823 = vmatprep.subr.bf16.mxu0 0
        %824 = vmatpush1.bf16.msra.mxu0 0
        %825 = vmatprep.mubr.bf16.mxu0 0
        %826 = vmatmul.mubr.bf16.gmra.mrb[0].mxu0 %v777
        %v827 = vpop.f32.mrb[0].mxu0
        %v828 = vadd.f32 0.0, %v827
        %v829 = vpop.f32.mrb[0].mxu0
        %v830 = vpop.f32.mrb[0].mxu0
        %v831 = vadd.f32 0.0, %v830
        %v832 = vpop.f32.mrb[0].mxu0
        %833 = vmatprep.mubr.bf16.mxu0 0
        %834 = vmatmul.mubr.bf16.gmra.mrb[0].mxu0 %v778
        %v835 = vpop.f32.mrb[0].mxu0
        %v836 = vadd.f32 0.0, %v835
        %v837 = vpop.f32.mrb[0].mxu0
        %v838 = vpop.f32.mrb[0].mxu0
        %v839 = vadd.f32 0.0, %v838
        %v840 = vpop.f32.mrb[0].mxu0
        %841 = vmatprep.mubr.bf16.mxu0 0
        %842 = vmatmul.mubr.bf16.gmra.mrb[0].mxu0 %v779
        %v843 = vpop.f32.mrb[0].mxu0
        %v844 = vadd.f32 0.0, %v843
        %v845 = vpop.f32.mrb[0].mxu0
        %v846 = vpop.f32.mrb[0].mxu0
        %v847 = vadd.f32 0.0, %v846
        %v848 = vpop.f32.mrb[0].mxu0
        %849 = vmatprep.mubr.bf16.mxu0 0
        %850 = vmatmul.mubr.bf16.gmra.mrb[0].mxu0 %v780
        %v851 = vpop.f32.mrb[0].mxu0
        %v852 = vadd.f32 0.0, %v851
        %v853 = vpop.f32.mrb[0].mxu0
        %v854 = vpop.f32.mrb[0].mxu0
        %v855 = vadd.f32 0.0, %v854
        %v856 = vpop.f32.mrb[0].mxu0
        %857 = vmatprep.mubr.bf16.mxu0 0
        %858 = vmatmul.mubr.bf16.gmra.mrb[0].mxu0 %v781
        %v859 = vpop.f32.mrb[0].mxu0
        %v860 = vadd.f32 0.0, %v859
        %v861 = vpop.f32.mrb[0].mxu0
        %v862 = vpop.f32.mrb[0].mxu0
        %v863 = vadd.f32 0.0, %v862
        %v864 = vpop.f32.mrb[0].mxu0
        %865 = vmatprep.mubr.bf16.mxu0 0
        %866 = vmatmul.mubr.bf16.gmra.mrb[0].mxu0 %v782
        %v867 = vpop.f32.mrb[0].mxu0
        %v868 = vadd.f32 0.0, %v867
        %v869 = vpop.f32.mrb[0].mxu0
        %v870 = vpop.f32.mrb[0].mxu0
        %v871 = vadd.f32 0.0, %v870
        %v872 = vpop.f32.mrb[0].mxu0
        %873 = vmatprep.mubr.bf16.mxu0 0
        %874 = vmatmul.mubr.bf16.gmra.mrb[0].mxu0 %v783
        %v875 = vpop.f32.mrb[0].mxu0
        %v876 = vadd.f32 0.0, %v875
        %v877 = vpop.f32.mrb[0].mxu0
        %v878 = vpop.f32.mrb[0].mxu0
        %v879 = vadd.f32 0.0, %v878
        %v880 = vpop.f32.mrb[0].mxu0
        %881 = vmatprep.mubr.bf16.mxu0 0
        %882 = vmatmul.mubr.bf16.gmra.mrb[0].mxu0 %v784
        %v883 = vpop.f32.mrb[0].mxu0
        %v884 = vadd.f32 0.0, %v883
        %v885 = vpop.f32.mrb[0].mxu0
        %v886 = vpop.f32.mrb[0].mxu0
        %v887 = vadd.f32 0.0, %v886
        %v888 = vpop.f32.mrb[0].mxu0
        %889 = vdwg.mxu0
        %v890 = vmul.f32 %v644, %v828
        %v891 = vmul.f32 %v649, %v831
        %v892 = vmul.f32 %v654, %v836
        %v893 = vmul.f32 %v659, %v839
        %v894 = vmul.f32 %v664, %v844
        %v895 = vmul.f32 %v669, %v847
        %v896 = vmul.f32 %v674, %v852
        %v897 = vmul.f32 %v679, %v855
        %v898 = vmul.f32 %v684, %v860
        %v899 = vmul.f32 %v689, %v863
        %v900 = vmul.f32 %v694, %v868
        %v901 = vmul.f32 %v699, %v871
        %v902 = vmul.f32 %v704, %v876
        %v903 = vmul.f32 %v709, %v879
        %v904 = vmul.f32 %v714, %v884
        %v905 = vmul.f32 %v719, %v887
        %v906 = vld [vmem:[%s4] sm:$0x1]
        %v908 = vlaneseq
        %v909 = vshrl.u32 %v908, 7
        %v910 = vsub.s32 0, %v909
        %v911 = vrot.slane %v906, %v910
        %v913 = vadd.f32 %v890, %v911
        %v914 = vadd.f32 %v891, %v911
        %v915 = vadd.f32 %v892, %v911
        %v916 = vadd.f32 %v893, %v911
        %v917 = vadd.f32 %v894, %v911
        %v918 = vadd.f32 %v895, %v911
        %v919 = vadd.f32 %v896, %v911
        %v920 = vadd.f32 %v897, %v911
        %v921 = vadd.f32 %v898, %v911
        %v922 = vadd.f32 %v899, %v911
        %v923 = vadd.f32 %v900, %v911
        %v924 = vadd.f32 %v901, %v911
        %v925 = vadd.f32 %v902, %v911
        %v926 = vadd.f32 %v903, %v911
        %v927 = vadd.f32 %v904, %v911
        %v928 = vadd.f32 %v905, %v911
        %v929 = vmax.f32 %v913, 0.0
        %v930 = vmax.f32 %v914, 0.0
        %v931 = vmax.f32 %v915, 0.0
        %v932 = vmax.f32 %v916, 0.0
        %v933 = vmax.f32 %v917, 0.0
        %v934 = vmax.f32 %v918, 0.0
        %v935 = vmax.f32 %v919, 0.0
        %v936 = vmax.f32 %v920, 0.0
        %v937 = vmax.f32 %v921, 0.0
        %v938 = vmax.f32 %v922, 0.0
        %v939 = vmax.f32 %v923, 0.0
        %v940 = vmax.f32 %v924, 0.0
        %v941 = vmax.f32 %v925, 0.0
        %v942 = vmax.f32 %v926, 0.0
        %v943 = vmax.f32 %v927, 0.0
        %v944 = vmax.f32 %v928, 0.0
        %v945 = vpack.c.bf16 %v930, %v929
        %v946 = vpack.c.bf16 %v932, %v931
        %v947 = vpack.c.bf16 %v934, %v933
        %v948 = vpack.c.bf16 %v936, %v935
        %v949 = vpack.c.bf16 %v938, %v937
        %v950 = vpack.c.bf16 %v940, %v939
        %v951 = vpack.c.bf16 %v942, %v941
        %v952 = vpack.c.bf16 %v944, %v943
        %v953 = vld [vmem:[%s5] sm:$0xf]
        %v954 = vld [vmem:[%s5 + $0x4] sm:$0xf]
        %v955 = vld [vmem:[%s5 + $0x8] sm:$0xf]
        %v956 = vld [vmem:[%s5 + $0xc] sm:$0xf]
        %v957 = vld [vmem:[%s5 + $0x10] sm:$0xf]
        %v958 = vld [vmem:[%s5 + $0x14] sm:$0xf]
        %v959 = vld [vmem:[%s5 + $0x18] sm:$0xf]
        %v960 = vld [vmem:[%s5 + $0x1c] sm:$0xf]
        %v961 = vld [vmem:[%s5 + $0x20] sm:$0xf]
        %v962 = vld [vmem:[%s5 + $0x24] sm:$0xf]
        %v963 = vld [vmem:[%s5 + $0x28] sm:$0xf]
        %v964 = vld [vmem:[%s5 + $0x2c] sm:$0xf]
        %v965 = vld [vmem:[%s5 + $0x30] sm:$0xf]
        %v966 = vld [vmem:[%s5 + $0x34] sm:$0xf]
        %v967 = vld [vmem:[%s5 + $0x38] sm:$0xf]
        %v968 = vld [vmem:[%s5 + $0x3c] sm:$0xf]
        %v985 = vunpack.c.l.b16 %v953
        %v986 = vunpack.c.l.b16 %v954
        %v987 = vunpack.c.l.b16 %v955
        %v988 = vunpack.c.l.b16 %v956
        %v989 = vunpack.c.l.b16 %v957
        %v990 = vunpack.c.l.b16 %v958
        %v991 = vunpack.c.l.b16 %v959
        %v992 = vunpack.c.l.b16 %v960
        %v993 = vunpack.c.l.b16 %v961
        %v994 = vunpack.c.l.b16 %v962
        %v995 = vunpack.c.l.b16 %v963
        %v996 = vunpack.c.l.b16 %v964
        %v997 = vunpack.c.l.b16 %v965
        %v998 = vunpack.c.l.b16 %v966
        %v999 = vunpack.c.l.b16 %v967
        %v1000 = vunpack.c.l.b16 %v968
        %v1001 = vpack.c.b16 %v986, %v985
        %v1002 = vpack.c.b16 %v988, %v987
        %v1003 = vpack.c.b16 %v990, %v989
        %v1004 = vpack.c.b16 %v992, %v991
        %v1005 = vpack.c.b16 %v994, %v993
        %v1006 = vpack.c.b16 %v996, %v995
        %v1007 = vpack.c.b16 %v998, %v997
        %v1008 = vpack.c.b16 %v1000, %v999
        %1017 = vmatprep.subr.bf16.mxu0 0
        %1018 = vmatpush1.bf16.msra.mxu0 %v1001
        %1019 = vmatprep.subr.bf16.mxu0 0
        %1020 = vmatpush1.bf16.msra.mxu0 %v1002
        %1021 = vmatprep.subr.bf16.mxu0 0
        %1022 = vmatpush1.bf16.msra.mxu0 %v1003
        %1023 = vmatprep.subr.bf16.mxu0 0
        %1024 = vmatpush1.bf16.msra.mxu0 %v1004
        %1025 = vmatprep.subr.bf16.mxu0 0
        %1026 = vmatpush1.bf16.msra.mxu0 %v1005
        %1027 = vmatprep.subr.bf16.mxu0 0
        %1028 = vmatpush1.bf16.msra.mxu0 %v1006
        %1029 = vmatprep.subr.bf16.mxu0 0
        %1030 = vmatpush1.bf16.msra.mxu0 %v1007
        %1031 = vmatprep.subr.bf16.mxu0 0
        %1032 = vmatpush1.bf16.msra.mxu0 %v1008
        %1033 = vmatprep.subr.bf16.mxu0 0
        %1034 = vmatpush1.bf16.msra.mxu0 0
        %1035 = vmatprep.subr.bf16.mxu0 0
        %1036 = vmatpush1.bf16.msra.mxu0 0
        %1037 = vmatprep.subr.bf16.mxu0 0
        %1038 = vmatpush1.bf16.msra.mxu0 0
        %1039 = vmatprep.subr.bf16.mxu0 0
        %1040 = vmatpush1.bf16.msra.mxu0 0
        %1041 = vmatprep.subr.bf16.mxu0 0
        %1042 = vmatpush1.bf16.msra.mxu0 0
        %1043 = vmatprep.subr.bf16.mxu0 0
        %1044 = vmatpush1.bf16.msra.mxu0 0
        %1045 = vmatprep.subr.bf16.mxu0 0
        %1046 = vmatpush1.bf16.msra.mxu0 0
        %1047 = vmatprep.subr.bf16.mxu0 0
        %1048 = vmatpush1.bf16.msra.mxu0 0
        %1049 = vmatprep.mubr.bf16.mxu0 0
        %1050 = vmatmul.mubr.bf16.gmra.mrb[0].mxu0 %v945
        %v1051 = vpop.f32.mrb[0].mxu0
        %v1052 = vadd.f32 0.0, %v1051
        %v1053 = vpop.f32.mrb[0].mxu0
        %v1054 = vpop.f32.mrb[0].mxu0
        %v1055 = vadd.f32 0.0, %v1054
        %v1056 = vpop.f32.mrb[0].mxu0
        %1057 = vmatprep.mubr.bf16.mxu0 0
        %1058 = vmatmul.mubr.bf16.gmra.mrb[0].mxu0 %v946
        %v1059 = vpop.f32.mrb[0].mxu0
        %v1060 = vadd.f32 0.0, %v1059
        %v1061 = vpop.f32.mrb[0].mxu0
        %v1062 = vpop.f32.mrb[0].mxu0
        %v1063 = vadd.f32 0.0, %v1062
        %v1064 = vpop.f32.mrb[0].mxu0
        %1065 = vmatprep.mubr.bf16.mxu0 0
        %1066 = vmatmul.mubr.bf16.gmra.mrb[0].mxu0 %v947
        %v1067 = vpop.f32.mrb[0].mxu0
        %v1068 = vadd.f32 0.0, %v1067
        %v1069 = vpop.f32.mrb[0].mxu0
        %v1070 = vpop.f32.mrb[0].mxu0
        %v1071 = vadd.f32 0.0, %v1070
        %v1072 = vpop.f32.mrb[0].mxu0
        %1073 = vmatprep.mubr.bf16.mxu0 0
        %1074 = vmatmul.mubr.bf16.gmra.mrb[0].mxu0 %v948
        %v1075 = vpop.f32.mrb[0].mxu0
        %v1076 = vadd.f32 0.0, %v1075
        %v1077 = vpop.f32.mrb[0].mxu0
        %v1078 = vpop.f32.mrb[0].mxu0
        %v1079 = vadd.f32 0.0, %v1078
        %v1080 = vpop.f32.mrb[0].mxu0
        %1081 = vmatprep.mubr.bf16.mxu0 0
        %1082 = vmatmul.mubr.bf16.gmra.mrb[0].mxu0 %v949
        %v1083 = vpop.f32.mrb[0].mxu0
        %v1084 = vadd.f32 0.0, %v1083
        %v1085 = vpop.f32.mrb[0].mxu0
        %v1086 = vpop.f32.mrb[0].mxu0
        %v1087 = vadd.f32 0.0, %v1086
        %v1088 = vpop.f32.mrb[0].mxu0
        %1089 = vmatprep.mubr.bf16.mxu0 0
        %1090 = vmatmul.mubr.bf16.gmra.mrb[0].mxu0 %v950
        %v1091 = vpop.f32.mrb[0].mxu0
        %v1092 = vadd.f32 0.0, %v1091
        %v1093 = vpop.f32.mrb[0].mxu0
        %v1094 = vpop.f32.mrb[0].mxu0
        %v1095 = vadd.f32 0.0, %v1094
        %v1096 = vpop.f32.mrb[0].mxu0
        %1097 = vmatprep.mubr.bf16.mxu0 0
        %1098 = vmatmul.mubr.bf16.gmra.mrb[0].mxu0 %v951
        %v1099 = vpop.f32.mrb[0].mxu0
        %v1100 = vadd.f32 0.0, %v1099
        %v1101 = vpop.f32.mrb[0].mxu0
        %v1102 = vpop.f32.mrb[0].mxu0
        %v1103 = vadd.f32 0.0, %v1102
        %v1104 = vpop.f32.mrb[0].mxu0
        %1105 = vmatprep.mubr.bf16.mxu0 0
        %1106 = vmatmul.mubr.bf16.gmra.mrb[0].mxu0 %v952
        %v1107 = vpop.f32.mrb[0].mxu0
        %v1108 = vadd.f32 0.0, %v1107
        %v1109 = vpop.f32.mrb[0].mxu0
        %v1110 = vpop.f32.mrb[0].mxu0
        %v1111 = vadd.f32 0.0, %v1110
        %v1112 = vpop.f32.mrb[0].mxu0
        %1113 = vdwg.mxu0
        %v1114 = vmul.f32 %v644, %v1052
        %v1115 = vmul.f32 %v649, %v1055
        %v1116 = vmul.f32 %v654, %v1060
        %v1117 = vmul.f32 %v659, %v1063
        %v1118 = vmul.f32 %v664, %v1068
        %v1119 = vmul.f32 %v669, %v1071
        %v1120 = vmul.f32 %v674, %v1076
        %v1121 = vmul.f32 %v679, %v1079
        %v1122 = vmul.f32 %v684, %v1084
        %v1123 = vmul.f32 %v689, %v1087
        %v1124 = vmul.f32 %v694, %v1092
        %v1125 = vmul.f32 %v699, %v1095
        %v1126 = vmul.f32 %v704, %v1100
        %v1127 = vmul.f32 %v709, %v1103
        %v1128 = vmul.f32 %v714, %v1108
        %v1129 = vmul.f32 %v719, %v1111
        %v1130 = vpack.c.bf16 %v1115, %v1114
        %v1131 = vpack.c.bf16 %v1117, %v1116
        %v1132 = vpack.c.bf16 %v1119, %v1118
        %v1133 = vpack.c.bf16 %v1121, %v1120
        %v1134 = vpack.c.bf16 %v1123, %v1122
        %v1135 = vpack.c.bf16 %v1125, %v1124
        %v1136 = vpack.c.bf16 %v1127, %v1126
        %v1137 = vpack.c.bf16 %v1129, %v1128
        %1138 = vmatprep.subr.bf16.mxu0 0
        %1139 = vmatpush1.bf16.msra.mxu0 %v1130
        %1140 = vmatprep.subr.bf16.mxu0 0
        %1141 = vmatpush1.bf16.msra.mxu0 %v1131
        %1142 = vmatprep.subr.bf16.mxu0 0
        %1143 = vmatpush1.bf16.msra.mxu0 %v1132
        %1144 = vmatprep.subr.bf16.mxu0 0
        %1145 = vmatpush1.bf16.msra.mxu0 %v1133
        %1146 = vmatprep.subr.bf16.mxu0 0
        %1147 = vmatpush1.bf16.msra.mxu0 %v1134
        %1148 = vmatprep.subr.bf16.mxu0 0
        %1149 = vmatpush1.bf16.msra.mxu0 %v1135
        %1150 = vmatprep.subr.bf16.mxu0 0
        %1151 = vmatpush1.bf16.msra.mxu0 %v1136
        %1152 = vmatprep.subr.bf16.mxu0 0
        %1153 = vmatpush1.bf16.msra.mxu0 %v1137
        %1154 = vmatprep.subr.bf16.mxu0 0
        %1155 = vmatpush1.bf16.msra.mxu0 0
        %1156 = vmatprep.subr.bf16.mxu0 0
        %1157 = vmatpush1.bf16.msra.mxu0 0
        %1158 = vmatprep.subr.bf16.mxu0 0
        %1159 = vmatpush1.bf16.msra.mxu0 0
        %1160 = vmatprep.subr.bf16.mxu0 0
        %1161 = vmatpush1.bf16.msra.mxu0 0
        %1162 = vmatprep.subr.bf16.mxu0 0
        %1163 = vmatpush1.bf16.msra.mxu0 0
        %1164 = vmatprep.subr.bf16.mxu0 0
        %1165 = vmatpush1.bf16.msra.mxu0 0
        %1166 = vmatprep.subr.bf16.mxu0 0
        %1167 = vmatpush1.bf16.msra.mxu0 0
        %1168 = vmatprep.subr.bf16.mxu0 0
        %1169 = vmatpush1.bf16.msra.mxu0 0
        %1170 = vmatprep.mubr.bf16.mxu0 0
        %1171 = vmatmul.mubr.bf16.gmra.mrb[0].mxu0 %v777
        %v1172 = vpop.f32.mrb[0].mxu0
        %v1173 = vadd.f32 0.0, %v1172
        %v1174 = vpop.f32.mrb[0].mxu0
        %v1175 = vpop.f32.mrb[0].mxu0
        %v1176 = vadd.f32 0.0, %v1175
        %v1177 = vpop.f32.mrb[0].mxu0
        %1178 = vmatprep.mubr.bf16.mxu0 0
        %1179 = vmatmul.mubr.bf16.gmra.mrb[0].mxu0 %v778
        %v1180 = vpop.f32.mrb[0].mxu0
        %v1181 = vadd.f32 0.0, %v1180
        %v1182 = vpop.f32.mrb[0].mxu0
        %v1183 = vpop.f32.mrb[0].mxu0
        %v1184 = vadd.f32 0.0, %v1183
        %v1185 = vpop.f32.mrb[0].mxu0
        %1186 = vmatprep.mubr.bf16.mxu0 0
        %1187 = vmatmul.mubr.bf16.gmra.mrb[0].mxu0 %v779
        %v1188 = vpop.f32.mrb[0].mxu0
        %v1189 = vadd.f32 0.0, %v1188
        %v1190 = vpop.f32.mrb[0].mxu0
        %v1191 = vpop.f32.mrb[0].mxu0
        %v1192 = vadd.f32 0.0, %v1191
        %v1193 = vpop.f32.mrb[0].mxu0
        %1194 = vmatprep.mubr.bf16.mxu0 0
        %1195 = vmatmul.mubr.bf16.gmra.mrb[0].mxu0 %v780
        %v1196 = vpop.f32.mrb[0].mxu0
        %v1197 = vadd.f32 0.0, %v1196
        %v1198 = vpop.f32.mrb[0].mxu0
        %v1199 = vpop.f32.mrb[0].mxu0
        %v1200 = vadd.f32 0.0, %v1199
        %v1201 = vpop.f32.mrb[0].mxu0
        %1202 = vmatprep.mubr.bf16.mxu0 0
        %1203 = vmatmul.mubr.bf16.gmra.mrb[0].mxu0 %v781
        %v1204 = vpop.f32.mrb[0].mxu0
        %v1205 = vadd.f32 0.0, %v1204
        %v1206 = vpop.f32.mrb[0].mxu0
        %v1207 = vpop.f32.mrb[0].mxu0
        %v1208 = vadd.f32 0.0, %v1207
        %v1209 = vpop.f32.mrb[0].mxu0
        %1210 = vmatprep.mubr.bf16.mxu0 0
        %1211 = vmatmul.mubr.bf16.gmra.mrb[0].mxu0 %v782
        %v1212 = vpop.f32.mrb[0].mxu0
        %v1213 = vadd.f32 0.0, %v1212
        %v1214 = vpop.f32.mrb[0].mxu0
        %v1215 = vpop.f32.mrb[0].mxu0
        %v1216 = vadd.f32 0.0, %v1215
        %v1217 = vpop.f32.mrb[0].mxu0
        %1218 = vmatprep.mubr.bf16.mxu0 0
        %1219 = vmatmul.mubr.bf16.gmra.mrb[0].mxu0 %v783
        %v1220 = vpop.f32.mrb[0].mxu0
        %v1221 = vadd.f32 0.0, %v1220
        %v1222 = vpop.f32.mrb[0].mxu0
        %v1223 = vpop.f32.mrb[0].mxu0
        %v1224 = vadd.f32 0.0, %v1223
        %v1225 = vpop.f32.mrb[0].mxu0
        %1226 = vmatprep.mubr.bf16.mxu0 0
        %1227 = vmatmul.mubr.bf16.gmra.mrb[0].mxu0 %v784
        %v1228 = vpop.f32.mrb[0].mxu0
        %v1229 = vadd.f32 0.0, %v1228
        %v1230 = vpop.f32.mrb[0].mxu0
        %v1231 = vpop.f32.mrb[0].mxu0
        %v1232 = vadd.f32 0.0, %v1231
        %v1233 = vpop.f32.mrb[0].mxu0
        %1234 = vdwg.mxu0
        %v1235 = vmul.f32 %v644, %v1173
        %v1236 = vmul.f32 %v649, %v1176
        %v1237 = vmul.f32 %v654, %v1181
        %v1238 = vmul.f32 %v659, %v1184
        %v1239 = vmul.f32 %v664, %v1189
        %v1240 = vmul.f32 %v669, %v1192
        %v1241 = vmul.f32 %v674, %v1197
        %v1242 = vmul.f32 %v679, %v1200
        %v1243 = vmul.f32 %v684, %v1205
        %v1244 = vmul.f32 %v689, %v1208
        %v1245 = vmul.f32 %v694, %v1213
        %v1246 = vmul.f32 %v699, %v1216
        %v1247 = vmul.f32 %v704, %v1221
        %v1248 = vmul.f32 %v709, %v1224
        %v1249 = vmul.f32 %v714, %v1229
        %v1250 = vmul.f32 %v719, %v1232
        %v1251 = vld [vmem:[%s6] sm:$0x1]
        %v1253 = vlaneseq
        %v1254 = vshrl.u32 %v1253, 7
        %v1255 = vsub.s32 0, %v1254
        %v1256 = vrot.slane %v1251, %v1255
        %v1258 = vadd.f32 %v1235, %v1256
        %v1259 = vadd.f32 %v1236, %v1256
        %v1260 = vadd.f32 %v1237, %v1256
        %v1261 = vadd.f32 %v1238, %v1256
        %v1262 = vadd.f32 %v1239, %v1256
        %v1263 = vadd.f32 %v1240, %v1256
        %v1264 = vadd.f32 %v1241, %v1256
        %v1265 = vadd.f32 %v1242, %v1256
        %v1266 = vadd.f32 %v1243, %v1256
        %v1267 = vadd.f32 %v1244, %v1256
        %v1268 = vadd.f32 %v1245, %v1256
        %v1269 = vadd.f32 %v1246, %v1256
        %v1270 = vadd.f32 %v1247, %v1256
        %v1271 = vadd.f32 %v1248, %v1256
        %v1272 = vadd.f32 %v1249, %v1256
        %v1273 = vadd.f32 %v1250, %v1256
        %1274 = vst [vmem:[%s382] sm:$0xff] %v1258
        %1275 = vst [vmem:[%s382 + $0x8] sm:$0xff] %v1259
        %1276 = vst [vmem:[%s382 + $0x10] sm:$0xff] %v1260
        %1277 = vst [vmem:[%s382 + $0x18] sm:$0xff] %v1261
        %1278 = vst [vmem:[%s382 + $0x20] sm:$0xff] %v1262
        %1279 = vst [vmem:[%s382 + $0x28] sm:$0xff] %v1263
        %1280 = vst [vmem:[%s382 + $0x30] sm:$0xff] %v1264
        %1281 = vst [vmem:[%s382 + $0x38] sm:$0xff] %v1265
        %1282 = vst [vmem:[%s382 + $0x40] sm:$0xff] %v1266
        %1283 = vst [vmem:[%s382 + $0x48] sm:$0xff] %v1267
        %1284 = vst [vmem:[%s382 + $0x50] sm:$0xff] %v1268
        %1285 = vst [vmem:[%s382 + $0x58] sm:$0xff] %v1269
        %1286 = vst [vmem:[%s382 + $0x60] sm:$0xff] %v1270
        %1287 = vst [vmem:[%s382 + $0x68] sm:$0xff] %v1271
        %1288 = vst [vmem:[%s382 + $0x70] sm:$0xff] %v1272
        %1289 = vst [vmem:[%s382 + $0x78] sm:$0xff] %v1273
        %v1290 = vld [vmem:[%s7] sm:$0xff]
        %v1291 = vld [vmem:[%s7 + $0x8] sm:$0xff]
        %v1292 = vld [vmem:[%s7 + $0x10] sm:$0xff]
        %v1293 = vld [vmem:[%s7 + $0x18] sm:$0xff]
        %v1294 = vld [vmem:[%s7 + $0x20] sm:$0xff]
        %v1295 = vld [vmem:[%s7 + $0x28] sm:$0xff]
        %v1296 = vld [vmem:[%s7 + $0x30] sm:$0xff]
        %v1297 = vld [vmem:[%s7 + $0x38] sm:$0xff]
        %v1298 = vld [vmem:[%s7 + $0x40] sm:$0xff]
        %v1299 = vld [vmem:[%s7 + $0x48] sm:$0xff]
        %v1300 = vld [vmem:[%s7 + $0x50] sm:$0xff]
        %v1301 = vld [vmem:[%s7 + $0x58] sm:$0xff]
        %v1302 = vld [vmem:[%s7 + $0x60] sm:$0xff]
        %v1303 = vld [vmem:[%s7 + $0x68] sm:$0xff]
        %v1304 = vld [vmem:[%s7 + $0x70] sm:$0xff]
        %v1305 = vld [vmem:[%s7 + $0x78] sm:$0xff]
        %1307 = vset.pattern.permute.xlu0 0
        %1308 = vperm.xlu0 %1307, %v1290
        %v1309 = vpop.permute.xlu0 %1308
        %1312 = vset.pattern.permute.xlu0 0
        %1313 = vperm.xlu0 %1312, %v1291
        %v1314 = vpop.permute.xlu0 %1313
        %1317 = vset.pattern.permute.xlu0 0
        %1318 = vperm.xlu0 %1317, %v1292
        %v1319 = vpop.permute.xlu0 %1318
        %1322 = vset.pattern.permute.xlu0 0
        %1323 = vperm.xlu0 %1322, %v1293
        %v1324 = vpop.permute.xlu0 %1323
        %1327 = vset.pattern.permute.xlu0 0
        %1328 = vperm.xlu0 %1327, %v1294
        %v1329 = vpop.permute.xlu0 %1328
        %1332 = vset.pattern.permute.xlu0 0
        %1333 = vperm.xlu0 %1332, %v1295
        %v1334 = vpop.permute.xlu0 %1333
        %1337 = vset.pattern.permute.xlu0 0
        %1338 = vperm.xlu0 %1337, %v1296
        %v1339 = vpop.permute.xlu0 %1338
        %1342 = vset.pattern.permute.xlu0 0
        %1343 = vperm.xlu0 %1342, %v1297
        %v1344 = vpop.permute.xlu0 %1343
        %1347 = vset.pattern.permute.xlu0 0
        %1348 = vperm.xlu0 %1347, %v1298
        %v1349 = vpop.permute.xlu0 %1348
        %1352 = vset.pattern.permute.xlu0 0
        %1353 = vperm.xlu0 %1352, %v1299
        %v1354 = vpop.permute.xlu0 %1353
        %1357 = vset.pattern.permute.xlu0 0
        %1358 = vperm.xlu0 %1357, %v1300
        %v1359 = vpop.permute.xlu0 %1358
        %1362 = vset.pattern.permute.xlu0 0
        %1363 = vperm.xlu0 %1362, %v1301
        %v1364 = vpop.permute.xlu0 %1363
        %1367 = vset.pattern.permute.xlu0 0
        %1368 = vperm.xlu0 %1367, %v1302
        %v1369 = vpop.permute.xlu0 %1368
        %1372 = vset.pattern.permute.xlu0 0
        %1373 = vperm.xlu0 %1372, %v1303
        %v1374 = vpop.permute.xlu0 %1373
        %1377 = vset.pattern.permute.xlu0 0
        %1378 = vperm.xlu0 %1377, %v1304
        %v1379 = vpop.permute.xlu0 %1378
        %1382 = vset.pattern.permute.xlu0 0
        %1383 = vperm.xlu0 %1382, %v1305
        %v1384 = vpop.permute.xlu0 %1383
        %v1386 = vmul.f32 %v1309, %v1258
        %v1387 = vmul.f32 %v1314, %v1259
        %v1388 = vmul.f32 %v1319, %v1260
        %v1389 = vmul.f32 %v1324, %v1261
        %v1390 = vmul.f32 %v1329, %v1262
        %v1391 = vmul.f32 %v1334, %v1263
        %v1392 = vmul.f32 %v1339, %v1264
        %v1393 = vmul.f32 %v1344, %v1265
        %v1394 = vmul.f32 %v1349, %v1266
        %v1395 = vmul.f32 %v1354, %v1267
        %v1396 = vmul.f32 %v1359, %v1268
        %v1397 = vmul.f32 %v1364, %v1269
        %v1398 = vmul.f32 %v1369, %v1270
        %v1399 = vmul.f32 %v1374, %v1271
        %v1400 = vmul.f32 %v1379, %v1272
        %v1401 = vmul.f32 %v1384, %v1273
        %v1402 = vadd.f32 %v1386, %v1387
        %v1403 = vadd.f32 %v1402, %v1388
        %v1404 = vadd.f32 %v1403, %v1389
        %v1405 = vadd.f32 %v1404, %v1390
        %v1406 = vadd.f32 %v1405, %v1391
        %v1407 = vadd.f32 %v1406, %v1392
        %v1408 = vadd.f32 %v1407, %v1393
        %v1409 = vadd.f32 %v1408, %v1394
        %v1410 = vadd.f32 %v1409, %v1395
        %v1411 = vadd.f32 %v1410, %v1396
        %v1412 = vadd.f32 %v1411, %v1397
        %v1413 = vadd.f32 %v1412, %v1398
        %v1414 = vadd.f32 %v1413, %v1399
        %v1415 = vadd.f32 %v1414, %v1400
        %v1416 = vadd.f32 %v1415, %v1401
        %v1417 = vrot.slane %v1416, 4
        %v1418 = vadd.f32 %v1416, %v1417
        %v1419 = vrot.slane %v1418, 2
        %v1420 = vadd.f32 %v1418, %v1419
        %v1421 = vrot.slane %v1420, 1
        %v1422 = vadd.f32 %v1420, %v1421
        %1423 = vst [vmem:[%s362] sm:$0x1] %v1422
        %p1424 = scmp.lt.s32.totalorder %s24, 3
        %s1425 = scalar_select %p1424, %s24, 3
        %s1426 = smul.addr %s1425, 16
        %s1427 = smul.addr %s1426, 8
        %s1428 = scalar_lea.vmem %s8, %s1427
        %s1429 = sand.u32 %s241, 1
        %s1430 = scalar_lea.sflag [#allocation3], %s1429
        %s1431 = sand.u32 %s241, 1
        %s1432 = scalar_lea.vmem [#allocation2], %s1431
        // Predicated region
        $region53: #{gcc_forward_batched.1} parent=51 // pred_check
          %p1433 = pneg %p225
        $region54: #{gcc_forward_batched.1} parent=51 // pred_check_branch
          %1435 = sbr.rel (%p1433) target = $region56
        $region55: #{gcc_forward_batched.1} parent=51 // pred_region
          _
        $region56: #{gcc_forward_batched.1} parent=51 // pred_fallthru
          _
        // Predicated region
        $region57: #{gcc_forward_batched.1} parent=51 // pred_check
          %p1436 = pneg %p251
        $region58: #{gcc_forward_batched.1} parent=51 // pred_check_branch
          %1438 = sbr.rel (%p1436) target = $region60
        $region59: #{gcc_forward_batched.1} parent=51 // pred_region
          %s1440 = ssub.s32 16, 16
          %1441 = vsyncadd %s1430, %s1440
          %s1442 = smul.addr %s24, 16
          %s1443 = scalar_lea.hbm %s9, %s1442
          %s1445 = sshll.u32 %s1432, 4
          %s1446 = int_to_ptr.vmem [resolvable:$true] %s1445
          %1448 = dma.vmem_to_hbm [thread:$0]  %s1446, 16, %s1443, %s1430
        $region60: #{gcc_forward_batched.1} parent=51 // pred_fallthru
          _
      $region52: #{gcc_forward_batched.1} parent=5 // pred_fallthru
        _
      %p1449 = scmp.le.s32.totalorder 2, %s19
      // Predicated region
      $region61: #{gcc_forward_batched.1} parent=5 // pred_check
        %p1450 = pneg %p1449
      $region62: #{gcc_forward_batched.1} parent=5 // pred_check_branch
        %1452 = sbr.rel (%p1450) target = $region64
      $region63: #{gcc_forward_batched.1} parent=5 // pred_region
        %s1453 = ssub.s32 %s19, 2
        // Predicated region
        $region65: #{gcc_forward_batched.1} parent=63 // pred_check
          %p1454 = pneg %p231
        $region66: #{gcc_forward_batched.1} parent=63 // pred_check_branch
          %1456 = sbr.rel (%p1454) target = $region68
        $region67: #{gcc_forward_batched.1} parent=63 // pred_region
          %p1457 = scmp.lt.s32.totalorder %s25, 3
          %s1458 = scalar_select %p1457, %s25, 3
          %s1459 = smul.addr %s1458, 16
          %s1460 = smul.addr %s1459, 8
          %s1461 = scalar_lea.vmem %s8, %s1460
        $region68: #{gcc_forward_batched.1} parent=63 // pred_fallthru
          _
        // Predicated region
        $region69: #{gcc_forward_batched.1} parent=63 // pred_check
          %p1462 = pneg %p257
        $region70: #{gcc_forward_batched.1} parent=63 // pred_check_branch
          %1464 = sbr.rel (%p1462) target = $region72
        $region71: #{gcc_forward_batched.1} parent=63 // pred_region
          %s1465 = sand.u32 %s242, 1
          %s1466 = scalar_lea.sflag [#allocation3], %s1465
          %s1467 = sand.u32 %s242, 1
          %s1468 = scalar_lea.vmem [#allocation2], %s1467
          %1469 = dma.done %s1466, 16
        $region72: #{gcc_forward_batched.1} parent=63 // pred_fallthru
          _
      $region64: #{gcc_forward_batched.1} parent=5 // pred_fallthru
        _
    $region6: #{gcc_forward_batched.1} parent=1 // loop_footer
      %s23 = sadd.s32 1, %s19
    $region7: #{gcc_forward_batched.1} parent=1 // loop_footer_branch
      %18 = sbr.rel target = $region3
    $region8: #{gcc_forward_batched.1} parent=1 // loop_exit
      _
    %1470 = vsyncpa [#allocation3], 1
    %s1471 = scalar_lea.sflag [#allocation3], 1
    %1472 = vsyncpa %s1471, 1

</llo_original>
